<compile_context>
chip_gen: v7x
topology: tpu7x:2x2x1
jax: 0.10.0
libtpu: 0.0.40
codegen_flags: <defaults>
</compile_context>

<pallas_src>
from functools import partial

import jax
import jax.numpy as jnp
from jax import lax
from jax.experimental import pallas as pl
from jax.experimental.pallas import tpu as pltpu

VMEM_SPEC = pl.BlockSpec(memory_space=pltpu.MemorySpace.VMEM)
SMEM_SPEC = pl.BlockSpec(memory_space=pltpu.MemorySpace.SMEM)

LANE = 128
BN_EPS = 1e-5


def _round_up(x, m):
    return ((x + m - 1) // m) * m


def _mxu(a, w):
    # bf16 MXU operands, f32 accumulation; element-wise math stays f32.
    return jnp.dot(a.astype(jnp.bfloat16), w, preferred_element_type=jnp.float32)


def _batchnorm_train(x):
    # BatchNorm1d, training mode, default affine (gamma=1, beta=0), biased var.
    m = jnp.mean(x, axis=0, keepdims=True)
    v = jnp.mean(jnp.square(x - m), axis=0, keepdims=True)
    return (x - m) * lax.rsqrt(v + BN_EPS)


# ---------------------------------------------------------------------------
# Fused forward kernel
# ---------------------------------------------------------------------------
def _gated_gcn_kernel(src_ref, dst_ref, x_ref, exf_ref, sn_ref, se_ref,
                      wh_ref, bh_ref, wee_ref, bee_ref,
                      wnode_ref, bnode_ref, wc_ref, bc_ref,
                      w1_ref, b1_ref, w2_ref, b2_ref, w3_ref, b3_ref,
                      y_ref,
                      proj_ref, ce_ref, enew_ref, num_ref, den_ref):
    """embedding_h/e -> L GatedGCN layers -> mean_nodes -> MLP, all in VMEM."""
    N, Dp4 = proj_ref.shape
    Dp = Dp4 // 4
    M = enew_ref.shape[0]
    L = wnode_ref.shape[0]

    # embeddings
    H = _mxu(x_ref[...], wh_ref[...]) + bh_ref[...]          # [N, Dp]
    E = exf_ref[...] * wee_ref[...] + bee_ref[...]           # [M, Dp] Linear(1,Dh)
    sn = sn_ref[...]                                         # [N, 1]
    se = se_ref[...]                                         # [M, 1]

    for l in range(L):
        # Fused node projections: AX | BX | DX | EX from one wide MXU matmul.
        proj_ref[...] = _mxu(H, wnode_ref[l]) + bnode_ref[l]     # [N, 4*Dp]
        ce_ref[...] = _mxu(E, wc_ref[l]) + bc_ref[l]             # [M, Dp]
        num_ref[...] = jnp.zeros(num_ref.shape, num_ref.dtype)   # sum sigma*Bx
        den_ref[...] = jnp.zeros(den_ref.shape, den_ref.dtype)   # sum sigma

        # message + reduce: per-edge index gather from VMEM (src/dst scalars in
        # SMEM) and read-modify-write segment-sum into per-dst accumulators.
        def edge_body(e, carry):
            s = src_ref[e]
            d = dst_ref[e]
            row_s = proj_ref[pl.ds(s, 1), :]                 # [1, 4*Dp]
            row_d = proj_ref[pl.ds(d, 1), :]
            bx_j = row_s[:, Dp:2 * Dp]                       # edges.src['BX']
            dx_j = row_s[:, 2 * Dp:3 * Dp]                   # edges.src['DX']
            ex_j = row_d[:, 3 * Dp:4 * Dp]                   # edges.dst['EX']
            e_row = ce_ref[pl.ds(e, 1), :] + dx_j + ex_j     # edges.data['E']
            enew_ref[pl.ds(e, 1), :] = e_row
            sig = pl.reciprocal(1.0 + jnp.exp(-e_row), approx=True)   # EUP
            num_ref[pl.ds(d, 1), :] = num_ref[pl.ds(d, 1), :] + sig * bx_j
            den_ref[pl.ds(d, 1), :] = den_ref[pl.ds(d, 1), :] + sig
            return carry

        lax.fori_loop(0, M, edge_body, 0)

        # gated mean + snorm scaling
        ax = proj_ref[:, 0:Dp]
        # TODO(synk): a node with zero in-degree gives den=0 (NaN) here, while
        # DGL keeps the node's pre-reduce value; graphs here have in-degree>=1.
        Hn = (ax + num_ref[...] * pl.reciprocal(den_ref[...], approx=True)) * sn
        En = enew_ref[...] * se

        # BatchNorm (training-mode batch stats) + ReLU + residual
        H = H + jnp.maximum(_batchnorm_train(Hn), 0.0)
        E = E + jnp.maximum(_batchnorm_train(En), 0.0)

    # readout: dgl.mean_nodes (single graph) + MLP_layer (L=2)
    y = jnp.mean(H, axis=0, keepdims=True)                   # [1, Dp]
    y = jnp.maximum(_mxu(y, w1_ref[...]) + b1_ref[...], 0.0)
    y = jnp.maximum(_mxu(y, w2_ref[...]) + b2_ref[...], 0.0)
    y_ref[...] = _mxu(y, w3_ref[...]) + b3_ref[...]


# ---------------------------------------------------------------------------
# Wrapper (single ungridded call: everything fits VMEM at these sizes)
# ---------------------------------------------------------------------------
def gated_gcn_forward(packed, X, E_X, src, dst, snorm_n, snorm_e):
    N = X.shape[0]
    M = E_X.shape[0]
    Din_p = packed["wh"].shape[0]
    Dp = packed["bh"].shape[1]
    output_dim = packed["b3"].shape[1]

    X_p = jnp.pad(X.astype(jnp.float32), ((0, 0), (0, Din_p - X.shape[1])))

    return pl.pallas_call(
        _gated_gcn_kernel,
        out_shape=jax.ShapeDtypeStruct((1, output_dim), jnp.float32),
        in_specs=[SMEM_SPEC, SMEM_SPEC] + [VMEM_SPEC] * 18,
        out_specs=VMEM_SPEC,
        scratch_shapes=[
            pltpu.VMEM((N, 4 * Dp), jnp.float32),   # AX|BX|DX|EX per node
            pltpu.VMEM((M, Dp), jnp.float32),       # CE per edge
            pltpu.VMEM((M, Dp), jnp.float32),       # e_new per edge
            pltpu.VMEM((N, Dp), jnp.float32),       # sum_j sigma_j * Bx_j
            pltpu.VMEM((N, Dp), jnp.float32),       # sum_j sigma_j
        ],
    )(src, dst, X_p, E_X, snorm_n, snorm_e,
      packed["wh"], packed["bh"], packed["wee"], packed["bee"],
      packed["wnode"], packed["bnode"], packed["wc"], packed["bc"],
      packed["w1"], packed["b1"], packed["w2"], packed["b2"],
      packed["w3"], packed["b3"])


# ---------------------------------------------------------------------------
# Parameter init (PyTorch nn.Linear default: U(-1/sqrt(fan_in), ..)) + packing
# ---------------------------------------------------------------------------
def init_linear(key, din, dout):
    kw, kb = jax.random.split(key)
    bound = 1.0 / (din ** 0.5)
    w = jax.random.uniform(kw, (din, dout), jnp.float32, -bound, bound)
    b = jax.random.uniform(kb, (1, dout), jnp.float32, -bound, bound)
    return w, b


def init_params(key, input_dim, hidden_dim, output_dim, L):
    keys = jax.random.split(key, 2 + 5 * L + 3)
    it = iter(keys)
    params = {
        "emb_h": init_linear(next(it), input_dim, hidden_dim),
        "emb_e": init_linear(next(it), 1, hidden_dim),
        "layers": [tuple(init_linear(next(it), hidden_dim, hidden_dim)
                         for _ in range(5)) for _ in range(L)],   # (A,B,C,D,E)
    }
    params["mlp"] = [
        init_linear(next(it), hidden_dim, hidden_dim),
        init_linear(next(it), hidden_dim, hidden_dim),
        init_linear(next(it), hidden_dim, output_dim),
    ]
    return params


def pack_params(params, input_dim, hidden_dim, output_dim):
    """Zero-pad feature axes to the 128-lane width, fuse A|B|D|E into one wide
    weight, stack per-layer weights, cast MXU operands to bf16."""
    Dp = _round_up(hidden_dim, LANE)
    Din_p = _round_up(input_dim, LANE)

    def pad2(a, rows, cols):
        return jnp.pad(a, ((0, rows - a.shape[0]), (0, cols - a.shape[1])))

    wh, bh = params["emb_h"]
    wee, bee = params["emb_e"]
    packed = {
        "wh": pad2(wh, Din_p, Dp).astype(jnp.bfloat16),
        "bh": pad2(bh, 1, Dp),
        "wee": pad2(wee, 1, Dp),      # Linear(1, Dh) is a broadcast: keep f32
        "bee": pad2(bee, 1, Dp),
    }
    wns, bns, wcs, bcs = [], [], [], []
    for (wa, ba), (wb, bb), (wc, bc), (wd, bd), (we_, be_) in params["layers"]:
        wns.append(jnp.concatenate([pad2(w, Dp, Dp) for w in (wa, wb, wd, we_)],
                                   axis=1))
        bns.append(jnp.concatenate([pad2(b, 1, Dp) for b in (ba, bb, bd, be_)],
                                   axis=1))
        wcs.append(pad2(wc, Dp, Dp))
        bcs.append(pad2(bc, 1, Dp))
    packed["wnode"] = jnp.stack(wns).astype(jnp.bfloat16)    # [L, Dp, 4*Dp]
    packed["bnode"] = jnp.stack(bns)                         # [L, 1, 4*Dp]
    packed["wc"] = jnp.stack(wcs).astype(jnp.bfloat16)       # [L, Dp, Dp]
    packed["bc"] = jnp.stack(bcs)                            # [L, 1, Dp]

    (w1, b1), (w2, b2), (w3, b3) = params["mlp"]
    packed["w1"] = pad2(w1, Dp, Dp).astype(jnp.bfloat16)
    packed["b1"] = pad2(b1, 1, Dp)
    packed["w2"] = pad2(w2, Dp, Dp).astype(jnp.bfloat16)
    packed["b2"] = pad2(b2, 1, Dp)
    packed["w3"] = pad2(w3, Dp, output_dim).astype(jnp.bfloat16)
    packed["b3"] = b3
    return packed


# ---------------------------------------------------------------------------
if __name__ == "__main__":
    input_dim, hidden_dim, output_dim, L = 8, 32, 4, 2
    N, M = 16, 32            # nodes, edges (single graph)

    key = jax.random.PRNGKey(0)
    k1, k2, k3, k4, kp = jax.random.split(key, 5)

    # graph: ring (every node has >= 1 incoming edge, matching the DGL reduce
    # semantics) plus random extra edges
    src = jnp.concatenate(
        [jnp.arange(N), jax.random.randint(k1, (M - N,), 0, N)]).astype(jnp.int32)
    dst = jnp.concatenate(
        [(jnp.arange(N) + 1) % N, jax.random.randint(k2, (M - N,), 0, N)]
    ).astype(jnp.int32)

    X = jax.random.normal(k3, (N, input_dim), jnp.float32)
    E_X = jax.random.normal(k4, (M, 1), jnp.float32)
    snorm_n = jnp.full((N, 1), 1.0 / (N ** 0.5), jnp.float32)
    snorm_e = jnp.full((M, 1), 1.0 / (M ** 0.5), jnp.float32)

    params = init_params(kp, input_dim, hidden_dim, output_dim, L)
    packed = pack_params(params, input_dim, hidden_dim, output_dim)

    # TODO(synk): multi-graph batching (dgl.mean_nodes over a batched graph) is
    # specialized to a single graph; BatchNorm running stats are not tracked
    # (training-mode batch statistics, default affine gamma=1/beta=0).
    # TODO(synk): at larger N/M the projections and edge loop would be tiled
    # over a grid ("parallel" node/edge axes, "arbitrary" reduction axis), but
    # the global BatchNorm batch-stats and mean_nodes readout make the fused
    # single-block kernel the right shape at this scale.
    fwd = jax.jit(partial(gated_gcn_forward, packed))
    y = fwd(X, E_X, src, dst, snorm_n, snorm_e)
    jax.block_until_ready(y)
    assert y.shape == (1, output_dim)
    assert bool(jnp.isfinite(y).all())
    print("KERNEL_OK")
</pallas_src>

<mosaic_0001>
module attributes {stable_mosaic.version = 11 : i64} {
  func.func @_gated_gcn_kernel(%arg0: memref<32xi32, #tpu.memory_space<smem>>, %arg1: memref<32xi32, #tpu.memory_space<smem>>, %arg2: memref<16x128xf32, #tpu.memory_space<vmem>>, %arg3: memref<32x1xf32, #tpu.memory_space<vmem>>, %arg4: memref<16x1xf32, #tpu.memory_space<vmem>>, %arg5: memref<32x1xf32, #tpu.memory_space<vmem>>, %arg6: memref<128x128xbf16, #tpu.memory_space<vmem>>, %arg7: memref<1x128xf32, #tpu.memory_space<vmem>>, %arg8: memref<1x128xf32, #tpu.memory_space<vmem>>, %arg9: memref<1x128xf32, #tpu.memory_space<vmem>>, %arg10: memref<2x128x512xbf16, #tpu.memory_space<vmem>>, %arg11: memref<2x1x512xf32, #tpu.memory_space<vmem>>, %arg12: memref<2x128x128xbf16, #tpu.memory_space<vmem>>, %arg13: memref<2x1x128xf32, #tpu.memory_space<vmem>>, %arg14: memref<128x128xbf16, #tpu.memory_space<vmem>>, %arg15: memref<1x128xf32, #tpu.memory_space<vmem>>, %arg16: memref<128x128xbf16, #tpu.memory_space<vmem>>, %arg17: memref<1x128xf32, #tpu.memory_space<vmem>>, %arg18: memref<128x4xbf16, #tpu.memory_space<vmem>>, %arg19: memref<1x4xf32, #tpu.memory_space<vmem>>, %arg20: memref<1x4xf32, #tpu.memory_space<vmem>>, %arg21: memref<16x512xf32, #tpu.memory_space<vmem>>, %arg22: memref<32x128xf32, #tpu.memory_space<vmem>>, %arg23: memref<32x128xf32, #tpu.memory_space<vmem>>, %arg24: memref<16x128xf32, #tpu.memory_space<vmem>>, %arg25: memref<16x128xf32, #tpu.memory_space<vmem>>) attributes {dimension_semantics = [], scalar_prefetch = 0 : i64, scratch_operands = 5 : i64, tpu.core_type = #tpu.core_type<tc>} {
    %c0 = arith.constant 0 : index
    %c0_0 = arith.constant 0 : index
    %0 = vector.load %arg2[%c0, %c0_0] : memref<16x128xf32, #tpu.memory_space<vmem>>, vector<16x128xf32>
    %c0_1 = arith.constant 0 : index
    %c0_2 = arith.constant 0 : index
    %1 = vector.load %arg6[%c0_1, %c0_2] : memref<128x128xbf16, #tpu.memory_space<vmem>>, vector<128x128xbf16>
    %2 = arith.truncf %0 : vector<16x128xf32> to vector<16x128xbf16>
    %cst = arith.constant dense<0.000000e+00> : vector<16x128xf32>
    %3 = tpu.matmul %2, %1, %cst {dimension_numbers = #tpu.dot_dimension_numbers<[1], [0], [0], [1], [0, 0, 1, 1], [], []>} : vector<16x128xbf16>, vector<128x128xbf16>, vector<16x128xf32> -> vector<16x128xf32>
    %c0_3 = arith.constant 0 : index
    %c0_4 = arith.constant 0 : index
    %4 = vector.load %arg7[%c0_3, %c0_4] : memref<1x128xf32, #tpu.memory_space<vmem>>, vector<1x128xf32>
    %5 = vector.broadcast %4 : vector<1x128xf32> to vector<16x128xf32>
    %6 = arith.addf %3, %5 : vector<16x128xf32>
    %c0_5 = arith.constant 0 : index
    %c0_6 = arith.constant 0 : index
    %7 = vector.load %arg3[%c0_5, %c0_6] : memref<32x1xf32, #tpu.memory_space<vmem>>, vector<32x1xf32>
    %c0_7 = arith.constant 0 : index
    %c0_8 = arith.constant 0 : index
    %8 = vector.load %arg8[%c0_7, %c0_8] : memref<1x128xf32, #tpu.memory_space<vmem>>, vector<1x128xf32>
    %9 = vector.broadcast %7 : vector<32x1xf32> to vector<32x128xf32>
    %10 = vector.broadcast %8 : vector<1x128xf32> to vector<32x128xf32>
    %11 = arith.mulf %9, %10 : vector<32x128xf32>
    %c0_9 = arith.constant 0 : index
    %c0_10 = arith.constant 0 : index
    %12 = vector.load %arg9[%c0_9, %c0_10] : memref<1x128xf32, #tpu.memory_space<vmem>>, vector<1x128xf32>
    %13 = vector.broadcast %12 : vector<1x128xf32> to vector<32x128xf32>
    %14 = arith.addf %11, %13 : vector<32x128xf32>
    %c0_11 = arith.constant 0 : index
    %c0_12 = arith.constant 0 : index
    %15 = vector.load %arg4[%c0_11, %c0_12] : memref<16x1xf32, #tpu.memory_space<vmem>>, vector<16x1xf32>
    %c0_13 = arith.constant 0 : index
    %c0_14 = arith.constant 0 : index
    %16 = vector.load %arg5[%c0_13, %c0_14] : memref<32x1xf32, #tpu.memory_space<vmem>>, vector<32x1xf32>
    %c0_15 = arith.constant 0 : index
    %c0_16 = arith.constant 0 : index
    %c0_17 = arith.constant 0 : index
    %17 = vector.load %arg10[%c0_15, %c0_16, %c0_17] : memref<2x128x512xbf16, #tpu.memory_space<vmem>>, vector<1x128x512xbf16>
    %18 = vector.shape_cast %17 : vector<1x128x512xbf16> to vector<128x512xbf16>
    %19 = arith.truncf %6 : vector<16x128xf32> to vector<16x128xbf16>
    %cst_18 = arith.constant dense<0.000000e+00> : vector<16x512xf32>
    %20 = tpu.matmul %19, %18, %cst_18 {dimension_numbers = #tpu.dot_dimension_numbers<[1], [0], [0], [1], [0, 0, 1, 1], [], []>} : vector<16x128xbf16>, vector<128x512xbf16>, vector<16x512xf32> -> vector<16x512xf32>
    %c0_19 = arith.constant 0 : index
    %c0_20 = arith.constant 0 : index
    %c0_21 = arith.constant 0 : index
    %21 = vector.load %arg11[%c0_19, %c0_20, %c0_21] : memref<2x1x512xf32, #tpu.memory_space<vmem>>, vector<1x1x512xf32>
    %22 = vector.shape_cast %21 : vector<1x1x512xf32> to vector<1x512xf32>
    %23 = vector.broadcast %22 : vector<1x512xf32> to vector<16x512xf32>
    %24 = arith.addf %20, %23 : vector<16x512xf32>
    %c0_22 = arith.constant 0 : index
    %c0_23 = arith.constant 0 : index
    %25 = vector.load %arg21[%c0_22, %c0_23] : memref<16x512xf32, #tpu.memory_space<vmem>>, vector<16x512xf32>
    tpu.vector_store %arg21[%c0_22, %c0_23], %24 {strides = array<i32>} : memref<16x512xf32, #tpu.memory_space<vmem>>, vector<16x512xf32>,
    %c0_24 = arith.constant 0 : index
    %c0_25 = arith.constant 0 : index
    %c0_26 = arith.constant 0 : index
    %26 = vector.load %arg12[%c0_24, %c0_25, %c0_26] : memref<2x128x128xbf16, #tpu.memory_space<vmem>>, vector<1x128x128xbf16>
    %27 = vector.shape_cast %26 : vector<1x128x128xbf16> to vector<128x128xbf16>
    %28 = arith.truncf %14 : vector<32x128xf32> to vector<32x128xbf16>
    %cst_27 = arith.constant dense<0.000000e+00> : vector<32x128xf32>
    %29 = tpu.matmul %28, %27, %cst_27 {dimension_numbers = #tpu.dot_dimension_numbers<[1], [0], [0], [1], [0, 0, 1, 1], [], []>} : vector<32x128xbf16>, vector<128x128xbf16>, vector<32x128xf32> -> vector<32x128xf32>
    %c0_28 = arith.constant 0 : index
    %c0_29 = arith.constant 0 : index
    %c0_30 = arith.constant 0 : index
    %30 = vector.load %arg13[%c0_28, %c0_29, %c0_30] : memref<2x1x128xf32, #tpu.memory_space<vmem>>, vector<1x1x128xf32>
    %31 = vector.shape_cast %30 : vector<1x1x128xf32> to vector<1x128xf32>
    %32 = vector.broadcast %31 : vector<1x128xf32> to vector<32x128xf32>
    %33 = arith.addf %29, %32 : vector<32x128xf32>
    %c0_31 = arith.constant 0 : index
    %c0_32 = arith.constant 0 : index
    %34 = vector.load %arg22[%c0_31, %c0_32] : memref<32x128xf32, #tpu.memory_space<vmem>>, vector<32x128xf32>
    tpu.vector_store %arg22[%c0_31, %c0_32], %33 {strides = array<i32>} : memref<32x128xf32, #tpu.memory_space<vmem>>, vector<32x128xf32>,
    %cst_33 = arith.constant 0.000000e+00 : f32
    %35 = vector.broadcast %cst_33 : f32 to vector<16x128xf32>
    %c0_34 = arith.constant 0 : index
    %c0_35 = arith.constant 0 : index
    %36 = vector.load %arg24[%c0_34, %c0_35] : memref<16x128xf32, #tpu.memory_space<vmem>>, vector<16x128xf32>
    tpu.vector_store %arg24[%c0_34, %c0_35], %35 {strides = array<i32>} : memref<16x128xf32, #tpu.memory_space<vmem>>, vector<16x128xf32>,
    %cst_36 = arith.constant 0.000000e+00 : f32
    %37 = vector.broadcast %cst_36 : f32 to vector<16x128xf32>
    %c0_37 = arith.constant 0 : index
    %c0_38 = arith.constant 0 : index
    %38 = vector.load %arg25[%c0_37, %c0_38] : memref<16x128xf32, #tpu.memory_space<vmem>>, vector<16x128xf32>
    tpu.vector_store %arg25[%c0_37, %c0_38], %37 {strides = array<i32>} : memref<16x128xf32, #tpu.memory_space<vmem>>, vector<16x128xf32>,
    %c0_i32 = arith.constant 0 : i32
    %c32_i32 = arith.constant 32 : i32
    %39 = arith.addi %c0_i32, %c32_i32 : i32
    %c1_i32 = arith.constant 1 : i32
    scf.for %arg26 = %c0_i32 to %39 step %c1_i32  : i32 {
      %169 = arith.index_cast %arg26 : i32 to index
      %170 = memref.load %arg0[%169] : memref<32xi32, #tpu.memory_space<smem>>
      %171 = arith.index_cast %arg26 : i32 to index
      %172 = memref.load %arg1[%171] : memref<32xi32, #tpu.memory_space<smem>>
      %173 = arith.index_cast %170 : i32 to index
      %c0_120 = arith.constant 0 : index
      %174 = vector.load %arg21[%173, %c0_120] : memref<16x512xf32, #tpu.memory_space<vmem>>, vector<1x512xf32>
      %175 = arith.index_cast %172 : i32 to index
      %c0_121 = arith.constant 0 : index
      %176 = vector.load %arg21[%175, %c0_121] : memref<16x512xf32, #tpu.memory_space<vmem>>, vector<1x512xf32>
      %177 = vector.extract_strided_slice %174 {offsets = [0, 128], sizes = [1, 128], strides = [1, 1]} : vector<1x512xf32> to vector<1x128xf32>
      %178 = vector.extract_strided_slice %174 {offsets = [0, 256], sizes = [1, 128], strides = [1, 1]} : vector<1x512xf32> to vector<1x128xf32>
      %179 = vector.extract_strided_slice %176 {offsets = [0, 384], sizes = [1, 128], strides = [1, 1]} : vector<1x512xf32> to vector<1x128xf32>
      %180 = arith.index_cast %arg26 : i32 to index
      %c0_122 = arith.constant 0 : index
      %181 = vector.load %arg22[%180, %c0_122] : memref<32x128xf32, #tpu.memory_space<vmem>>, vector<1x128xf32>
      %182 = arith.addf %181, %178 : vector<1x128xf32>
      %183 = arith.addf %182, %179 : vector<1x128xf32>
      %184 = arith.index_cast %arg26 : i32 to index
      %c0_123 = arith.constant 0 : index
      %185 = vector.load %arg23[%184, %c0_123] : memref<32x128xf32, #tpu.memory_space<vmem>>, vector<1x128xf32>
      tpu.vector_store %arg23[%184, %c0_123], %183 {strides = array<i32>} : memref<32x128xf32, #tpu.memory_space<vmem>>, vector<1x128xf32>,
      %cst_124 = arith.constant 0.000000e+00 : f32
      %186 = vector.broadcast %cst_124 : f32 to vector<1x128xf32>
      %187 = arith.subf %186, %183 : vector<1x128xf32>
      %188 = math.exp %187 : vector<1x128xf32>
      %cst_125 = arith.constant 1.000000e+00 : f32
      %189 = vector.broadcast %cst_125 : f32 to vector<1x128xf32>
      %190 = arith.addf %189, %188 : vector<1x128xf32>
      %191 = tpu.reciprocal %190 {approx = true} : vector<1x128xf32> -> vector<1x128xf32>
      %192 = arith.index_cast %172 : i32 to index
      %c0_126 = arith.constant 0 : index
      %193 = vector.load %arg24[%192, %c0_126] : memref<16x128xf32, #tpu.memory_space<vmem>>, vector<1x128xf32>
      %194 = arith.mulf %191, %177 : vector<1x128xf32>
      %195 = arith.addf %193, %194 : vector<1x128xf32>
      %196 = arith.index_cast %172 : i32 to index
      %c0_127 = arith.constant 0 : index
      %197 = vector.load %arg24[%196, %c0_127] : memref<16x128xf32, #tpu.memory_space<vmem>>, vector<1x128xf32>
      tpu.vector_store %arg24[%196, %c0_127], %195 {strides = array<i32>} : memref<16x128xf32, #tpu.memory_space<vmem>>, vector<1x128xf32>,
      %198 = arith.index_cast %172 : i32 to index
      %c0_128 = arith.constant 0 : index
      %199 = vector.load %arg25[%198, %c0_128] : memref<16x128xf32, #tpu.memory_space<vmem>>, vector<1x128xf32>
      %200 = arith.addf %199, %191 : vector<1x128xf32>
      %201 = arith.index_cast %172 : i32 to index
      %c0_129 = arith.constant 0 : index
      %202 = vector.load %arg25[%201, %c0_129] : memref<16x128xf32, #tpu.memory_space<vmem>>, vector<1x128xf32>
      tpu.vector_store %arg25[%201, %c0_129], %200 {strides = array<i32>} : memref<16x128xf32, #tpu.memory_space<vmem>>, vector<1x128xf32>,
    }
    %c32_i32_39 = arith.constant 32 : i32
    %c0_40 = arith.constant 0 : index
    %c0_41 = arith.constant 0 : index
    %40 = vector.load %arg21[%c0_40, %c0_41] : memref<16x512xf32, #tpu.memory_space<vmem>>, vector<16x128xf32>
    %c0_42 = arith.constant 0 : index
    %c0_43 = arith.constant 0 : index
    %41 = vector.load %arg24[%c0_42, %c0_43] : memref<16x128xf32, #tpu.memory_space<vmem>>, vector<16x128xf32>
    %c0_44 = arith.constant 0 : index
    %c0_45 = arith.constant 0 : index
    %42 = vector.load %arg25[%c0_44, %c0_45] : memref<16x128xf32, #tpu.memory_space<vmem>>, vector<16x128xf32>
    %43 = tpu.reciprocal %42 {approx = true} : vector<16x128xf32> -> vector<16x128xf32>
    %44 = arith.mulf %41, %43 : vector<16x128xf32>
    %45 = arith.addf %40, %44 : vector<16x128xf32>
    %46 = vector.broadcast %15 : vector<16x1xf32> to vector<16x128xf32>
    %47 = arith.mulf %45, %46 : vector<16x128xf32>
    %c0_46 = arith.constant 0 : index
    %c0_47 = arith.constant 0 : index
    %48 = vector.load %arg23[%c0_46, %c0_47] : memref<32x128xf32, #tpu.memory_space<vmem>>, vector<32x128xf32>
    %49 = vector.broadcast %16 : vector<32x1xf32> to vector<32x128xf32>
    %50 = arith.mulf %48, %49 : vector<32x128xf32>
    %cst_48 = arith.constant dense<0.000000e+00> : vector<128xf32>
    %51 = vector.multi_reduction <add>, %47, %cst_48 [0] : vector<16x128xf32> to vector<128xf32>
    %52 = vector.shape_cast %51 : vector<128xf32> to vector<1x128xf32>
    %cst_49 = arith.constant 1.600000e+01 : f32
    %53 = vector.broadcast %cst_49 : f32 to vector<1x128xf32>
    %54 = arith.divf %52, %53 : vector<1x128xf32>
    %55 = vector.broadcast %54 : vector<1x128xf32> to vector<16x128xf32>
    %56 = arith.subf %47, %55 : vector<16x128xf32>
    %57 = arith.mulf %56, %56 : vector<16x128xf32>
    %cst_50 = arith.constant dense<0.000000e+00> : vector<128xf32>
    %58 = vector.multi_reduction <add>, %57, %cst_50 [0] : vector<16x128xf32> to vector<128xf32>
    %59 = vector.shape_cast %58 : vector<128xf32> to vector<1x128xf32>
    %cst_51 = arith.constant 1.600000e+01 : f32
    %60 = vector.broadcast %cst_51 : f32 to vector<1x128xf32>
    %61 = arith.divf %59, %60 : vector<1x128xf32>
    %62 = vector.broadcast %54 : vector<1x128xf32> to vector<16x128xf32>
    %63 = arith.subf %47, %62 : vector<16x128xf32>
    %cst_52 = arith.constant 9.99999974E-6 : f32
    %64 = vector.broadcast %cst_52 : f32 to vector<1x128xf32>
    %65 = arith.addf %61, %64 : vector<1x128xf32>
    %66 = math.rsqrt %65 : vector<1x128xf32>
    %67 = vector.broadcast %66 : vector<1x128xf32> to vector<16x128xf32>
    %68 = arith.mulf %63, %67 : vector<16x128xf32>
    %cst_53 = arith.constant 0.000000e+00 : f32
    %69 = vector.broadcast %cst_53 : f32 to vector<16x128xf32>
    %70 = arith.maximumf %68, %69 : vector<16x128xf32>
    %71 = arith.addf %6, %70 : vector<16x128xf32>
    %cst_54 = arith.constant dense<0.000000e+00> : vector<128xf32>
    %72 = vector.multi_reduction <add>, %50, %cst_54 [0] : vector<32x128xf32> to vector<128xf32>
    %73 = vector.shape_cast %72 : vector<128xf32> to vector<1x128xf32>
    %cst_55 = arith.constant 3.200000e+01 : f32
    %74 = vector.broadcast %cst_55 : f32 to vector<1x128xf32>
    %75 = arith.divf %73, %74 : vector<1x128xf32>
    %76 = vector.broadcast %75 : vector<1x128xf32> to vector<32x128xf32>
    %77 = arith.subf %50, %76 : vector<32x128xf32>
    %78 = arith.mulf %77, %77 : vector<32x128xf32>
    %cst_56 = arith.constant dense<0.000000e+00> : vector<128xf32>
    %79 = vector.multi_reduction <add>, %78, %cst_56 [0] : vector<32x128xf32> to vector<128xf32>
    %80 = vector.shape_cast %79 : vector<128xf32> to vector<1x128xf32>
    %cst_57 = arith.constant 3.200000e+01 : f32
    %81 = vector.broadcast %cst_57 : f32 to vector<1x128xf32>
    %82 = arith.divf %80, %81 : vector<1x128xf32>
    %83 = vector.broadcast %75 : vector<1x128xf32> to vector<32x128xf32>
    %84 = arith.subf %50, %83 : vector<32x128xf32>
    %cst_58 = arith.constant 9.99999974E-6 : f32
    %85 = vector.broadcast %cst_58 : f32 to vector<1x128xf32>
    %86 = arith.addf %82, %85 : vector<1x128xf32>
    %87 = math.rsqrt %86 : vector<1x128xf32>
    %88 = vector.broadcast %87 : vector<1x128xf32> to vector<32x128xf32>
    %89 = arith.mulf %84, %88 : vector<32x128xf32>
    %cst_59 = arith.constant 0.000000e+00 : f32
    %90 = vector.broadcast %cst_59 : f32 to vector<32x128xf32>
    %91 = arith.maximumf %89, %90 : vector<32x128xf32>
    %92 = arith.addf %14, %91 : vector<32x128xf32>
    %c1 = arith.constant 1 : index
    %c0_60 = arith.constant 0 : index
    %c0_61 = arith.constant 0 : index
    %93 = vector.load %arg10[%c1, %c0_60, %c0_61] : memref<2x128x512xbf16, #tpu.memory_space<vmem>>, vector<1x128x512xbf16>
    %94 = vector.shape_cast %93 : vector<1x128x512xbf16> to vector<128x512xbf16>
    %95 = arith.truncf %71 : vector<16x128xf32> to vector<16x128xbf16>
    %cst_62 = arith.constant dense<0.000000e+00> : vector<16x512xf32>
    %96 = tpu.matmul %95, %94, %cst_62 {dimension_numbers = #tpu.dot_dimension_numbers<[1], [0], [0], [1], [0, 0, 1, 1], [], []>} : vector<16x128xbf16>, vector<128x512xbf16>, vector<16x512xf32> -> vector<16x512xf32>
    %c1_63 = arith.constant 1 : index
    %c0_64 = arith.constant 0 : index
    %c0_65 = arith.constant 0 : index
    %97 = vector.load %arg11[%c1_63, %c0_64, %c0_65] : memref<2x1x512xf32, #tpu.memory_space<vmem>>, vector<1x1x512xf32>
    %98 = vector.shape_cast %97 : vector<1x1x512xf32> to vector<1x512xf32>
    %99 = vector.broadcast %98 : vector<1x512xf32> to vector<16x512xf32>
    %100 = arith.addf %96, %99 : vector<16x512xf32>
    %c0_66 = arith.constant 0 : index
    %c0_67 = arith.constant 0 : index
    %101 = vector.load %arg21[%c0_66, %c0_67] : memref<16x512xf32, #tpu.memory_space<vmem>>, vector<16x512xf32>
    tpu.vector_store %arg21[%c0_66, %c0_67], %100 {strides = array<i32>} : memref<16x512xf32, #tpu.memory_space<vmem>>, vector<16x512xf32>,
    %c1_68 = arith.constant 1 : index
    %c0_69 = arith.constant 0 : index
    %c0_70 = arith.constant 0 : index
    %102 = vector.load %arg12[%c1_68, %c0_69, %c0_70] : memref<2x128x128xbf16, #tpu.memory_space<vmem>>, vector<1x128x128xbf16>
    %103 = vector.shape_cast %102 : vector<1x128x128xbf16> to vector<128x128xbf16>
    %104 = arith.truncf %92 : vector<32x128xf32> to vector<32x128xbf16>
    %cst_71 = arith.constant dense<0.000000e+00> : vector<32x128xf32>
    %105 = tpu.matmul %104, %103, %cst_71 {dimension_numbers = #tpu.dot_dimension_numbers<[1], [0], [0], [1], [0, 0, 1, 1], [], []>} : vector<32x128xbf16>, vector<128x128xbf16>, vector<32x128xf32> -> vector<32x128xf32>
    %c1_72 = arith.constant 1 : index
    %c0_73 = arith.constant 0 : index
    %c0_74 = arith.constant 0 : index
    %106 = vector.load %arg13[%c1_72, %c0_73, %c0_74] : memref<2x1x128xf32, #tpu.memory_space<vmem>>, vector<1x1x128xf32>
    %107 = vector.shape_cast %106 : vector<1x1x128xf32> to vector<1x128xf32>
    %108 = vector.broadcast %107 : vector<1x128xf32> to vector<32x128xf32>
    %109 = arith.addf %105, %108 : vector<32x128xf32>
    %c0_75 = arith.constant 0 : index
    %c0_76 = arith.constant 0 : index
    %110 = vector.load %arg22[%c0_75, %c0_76] : memref<32x128xf32, #tpu.memory_space<vmem>>, vector<32x128xf32>
    tpu.vector_store %arg22[%c0_75, %c0_76], %109 {strides = array<i32>} : memref<32x128xf32, #tpu.memory_space<vmem>>, vector<32x128xf32>,
    %cst_77 = arith.constant 0.000000e+00 : f32
    %111 = vector.broadcast %cst_77 : f32 to vector<16x128xf32>
    %c0_78 = arith.constant 0 : index
    %c0_79 = arith.constant 0 : index
    %112 = vector.load %arg24[%c0_78, %c0_79] : memref<16x128xf32, #tpu.memory_space<vmem>>, vector<16x128xf32>
    tpu.vector_store %arg24[%c0_78, %c0_79], %111 {strides = array<i32>} : memref<16x128xf32, #tpu.memory_space<vmem>>, vector<16x128xf32>,
    %cst_80 = arith.constant 0.000000e+00 : f32
    %113 = vector.broadcast %cst_80 : f32 to vector<16x128xf32>
    %c0_81 = arith.constant 0 : index
    %c0_82 = arith.constant 0 : index
    %114 = vector.load %arg25[%c0_81, %c0_82] : memref<16x128xf32, #tpu.memory_space<vmem>>, vector<16x128xf32>
    tpu.vector_store %arg25[%c0_81, %c0_82], %113 {strides = array<i32>} : memref<16x128xf32, #tpu.memory_space<vmem>>, vector<16x128xf32>,
    %c0_i32_83 = arith.constant 0 : i32
    %c32_i32_84 = arith.constant 32 : i32
    %115 = arith.addi %c0_i32_83, %c32_i32_84 : i32
    %c1_i32_85 = arith.constant 1 : i32
    scf.for %arg26 = %c0_i32_83 to %115 step %c1_i32_85  : i32 {
      %169 = arith.index_cast %arg26 : i32 to index
      %170 = memref.load %arg0[%169] : memref<32xi32, #tpu.memory_space<smem>>
      %171 = arith.index_cast %arg26 : i32 to index
      %172 = memref.load %arg1[%171] : memref<32xi32, #tpu.memory_space<smem>>
      %173 = arith.index_cast %170 : i32 to index
      %c0_120 = arith.constant 0 : index
      %174 = vector.load %arg21[%173, %c0_120] : memref<16x512xf32, #tpu.memory_space<vmem>>, vector<1x512xf32>
      %175 = arith.index_cast %172 : i32 to index
      %c0_121 = arith.constant 0 : index
      %176 = vector.load %arg21[%175, %c0_121] : memref<16x512xf32, #tpu.memory_space<vmem>>, vector<1x512xf32>
      %177 = vector.extract_strided_slice %174 {offsets = [0, 128], sizes = [1, 128], strides = [1, 1]} : vector<1x512xf32> to vector<1x128xf32>
      %178 = vector.extract_strided_slice %174 {offsets = [0, 256], sizes = [1, 128], strides = [1, 1]} : vector<1x512xf32> to vector<1x128xf32>
      %179 = vector.extract_strided_slice %176 {offsets = [0, 384], sizes = [1, 128], strides = [1, 1]} : vector<1x512xf32> to vector<1x128xf32>
      %180 = arith.index_cast %arg26 : i32 to index
      %c0_122 = arith.constant 0 : index
      %181 = vector.load %arg22[%180, %c0_122] : memref<32x128xf32, #tpu.memory_space<vmem>>, vector<1x128xf32>
      %182 = arith.addf %181, %178 : vector<1x128xf32>
      %183 = arith.addf %182, %179 : vector<1x128xf32>
      %184 = arith.index_cast %arg26 : i32 to index
      %c0_123 = arith.constant 0 : index
      %185 = vector.load %arg23[%184, %c0_123] : memref<32x128xf32, #tpu.memory_space<vmem>>, vector<1x128xf32>
      tpu.vector_store %arg23[%184, %c0_123], %183 {strides = array<i32>} : memref<32x128xf32, #tpu.memory_space<vmem>>, vector<1x128xf32>,
      %cst_124 = arith.constant 0.000000e+00 : f32
      %186 = vector.broadcast %cst_124 : f32 to vector<1x128xf32>
      %187 = arith.subf %186, %183 : vector<1x128xf32>
      %188 = math.exp %187 : vector<1x128xf32>
      %cst_125 = arith.constant 1.000000e+00 : f32
      %189 = vector.broadcast %cst_125 : f32 to vector<1x128xf32>
      %190 = arith.addf %189, %188 : vector<1x128xf32>
      %191 = tpu.reciprocal %190 {approx = true} : vector<1x128xf32> -> vector<1x128xf32>
      %192 = arith.index_cast %172 : i32 to index
      %c0_126 = arith.constant 0 : index
      %193 = vector.load %arg24[%192, %c0_126] : memref<16x128xf32, #tpu.memory_space<vmem>>, vector<1x128xf32>
      %194 = arith.mulf %191, %177 : vector<1x128xf32>
      %195 = arith.addf %193, %194 : vector<1x128xf32>
      %196 = arith.index_cast %172 : i32 to index
      %c0_127 = arith.constant 0 : index
      %197 = vector.load %arg24[%196, %c0_127] : memref<16x128xf32, #tpu.memory_space<vmem>>, vector<1x128xf32>
      tpu.vector_store %arg24[%196, %c0_127], %195 {strides = array<i32>} : memref<16x128xf32, #tpu.memory_space<vmem>>, vector<1x128xf32>,
      %198 = arith.index_cast %172 : i32 to index
      %c0_128 = arith.constant 0 : index
      %199 = vector.load %arg25[%198, %c0_128] : memref<16x128xf32, #tpu.memory_space<vmem>>, vector<1x128xf32>
      %200 = arith.addf %199, %191 : vector<1x128xf32>
      %201 = arith.index_cast %172 : i32 to index
      %c0_129 = arith.constant 0 : index
      %202 = vector.load %arg25[%201, %c0_129] : memref<16x128xf32, #tpu.memory_space<vmem>>, vector<1x128xf32>
      tpu.vector_store %arg25[%201, %c0_129], %200 {strides = array<i32>} : memref<16x128xf32, #tpu.memory_space<vmem>>, vector<1x128xf32>,
    }
    %c32_i32_86 = arith.constant 32 : i32
    %c0_87 = arith.constant 0 : index
    %c0_88 = arith.constant 0 : index
    %116 = vector.load %arg21[%c0_87, %c0_88] : memref<16x512xf32, #tpu.memory_space<vmem>>, vector<16x128xf32>
    %c0_89 = arith.constant 0 : index
    %c0_90 = arith.constant 0 : index
    %117 = vector.load %arg24[%c0_89, %c0_90] : memref<16x128xf32, #tpu.memory_space<vmem>>, vector<16x128xf32>
    %c0_91 = arith.constant 0 : index
    %c0_92 = arith.constant 0 : index
    %118 = vector.load %arg25[%c0_91, %c0_92] : memref<16x128xf32, #tpu.memory_space<vmem>>, vector<16x128xf32>
    %119 = tpu.reciprocal %118 {approx = true} : vector<16x128xf32> -> vector<16x128xf32>
    %120 = arith.mulf %117, %119 : vector<16x128xf32>
    %121 = arith.addf %116, %120 : vector<16x128xf32>
    %122 = vector.broadcast %15 : vector<16x1xf32> to vector<16x128xf32>
    %123 = arith.mulf %121, %122 : vector<16x128xf32>
    %cst_93 = arith.constant dense<0.000000e+00> : vector<128xf32>
    %124 = vector.multi_reduction <add>, %123, %cst_93 [0] : vector<16x128xf32> to vector<128xf32>
    %125 = vector.shape_cast %124 : vector<128xf32> to vector<1x128xf32>
    %cst_94 = arith.constant 1.600000e+01 : f32
    %126 = vector.broadcast %cst_94 : f32 to vector<1x128xf32>
    %127 = arith.divf %125, %126 : vector<1x128xf32>
    %128 = vector.broadcast %127 : vector<1x128xf32> to vector<16x128xf32>
    %129 = arith.subf %123, %128 : vector<16x128xf32>
    %130 = arith.mulf %129, %129 : vector<16x128xf32>
    %cst_95 = arith.constant dense<0.000000e+00> : vector<128xf32>
    %131 = vector.multi_reduction <add>, %130, %cst_95 [0] : vector<16x128xf32> to vector<128xf32>
    %132 = vector.shape_cast %131 : vector<128xf32> to vector<1x128xf32>
    %cst_96 = arith.constant 1.600000e+01 : f32
    %133 = vector.broadcast %cst_96 : f32 to vector<1x128xf32>
    %134 = arith.divf %132, %133 : vector<1x128xf32>
    %135 = vector.broadcast %127 : vector<1x128xf32> to vector<16x128xf32>
    %136 = arith.subf %123, %135 : vector<16x128xf32>
    %cst_97 = arith.constant 9.99999974E-6 : f32
    %137 = vector.broadcast %cst_97 : f32 to vector<1x128xf32>
    %138 = arith.addf %134, %137 : vector<1x128xf32>
    %139 = math.rsqrt %138 : vector<1x128xf32>
    %140 = vector.broadcast %139 : vector<1x128xf32> to vector<16x128xf32>
    %141 = arith.mulf %136, %140 : vector<16x128xf32>
    %cst_98 = arith.constant 0.000000e+00 : f32
    %142 = vector.broadcast %cst_98 : f32 to vector<16x128xf32>
    %143 = arith.maximumf %141, %142 : vector<16x128xf32>
    %144 = arith.addf %71, %143 : vector<16x128xf32>
    %cst_99 = arith.constant dense<0.000000e+00> : vector<128xf32>
    %145 = vector.multi_reduction <add>, %144, %cst_99 [0] : vector<16x128xf32> to vector<128xf32>
    %146 = vector.shape_cast %145 : vector<128xf32> to vector<1x128xf32>
    %cst_100 = arith.constant 1.600000e+01 : f32
    %147 = vector.broadcast %cst_100 : f32 to vector<1x128xf32>
    %148 = arith.divf %146, %147 : vector<1x128xf32>
    %c0_101 = arith.constant 0 : index
    %c0_102 = arith.constant 0 : index
    %149 = vector.load %arg14[%c0_101, %c0_102] : memref<128x128xbf16, #tpu.memory_space<vmem>>, vector<128x128xbf16>
    %150 = arith.truncf %148 : vector<1x128xf32> to vector<1x128xbf16>
    %cst_103 = arith.constant dense<0.000000e+00> : vector<1x128xf32>
    %151 = tpu.matmul %150, %149, %cst_103 {dimension_numbers = #tpu.dot_dimension_numbers<[1], [0], [0], [1], [0, 0, 1, 1], [], []>} : vector<1x128xbf16>, vector<128x128xbf16>, vector<1x128xf32> -> vector<1x128xf32>
    %c0_104 = arith.constant 0 : index
    %c0_105 = arith.constant 0 : index
    %152 = vector.load %arg15[%c0_104, %c0_105] : memref<1x128xf32, #tpu.memory_space<vmem>>, vector<1x128xf32>
    %153 = arith.addf %151, %152 : vector<1x128xf32>
    %cst_106 = arith.constant 0.000000e+00 : f32
    %154 = vector.broadcast %cst_106 : f32 to vector<1x128xf32>
    %155 = arith.maximumf %153, %154 : vector<1x128xf32>
    %c0_107 = arith.constant 0 : index
    %c0_108 = arith.constant 0 : index
    %156 = vector.load %arg16[%c0_107, %c0_108] : memref<128x128xbf16, #tpu.memory_space<vmem>>, vector<128x128xbf16>
    %157 = arith.truncf %155 : vector<1x128xf32> to vector<1x128xbf16>
    %cst_109 = arith.constant dense<0.000000e+00> : vector<1x128xf32>
    %158 = tpu.matmul %157, %156, %cst_109 {dimension_numbers = #tpu.dot_dimension_numbers<[1], [0], [0], [1], [0, 0, 1, 1], [], []>} : vector<1x128xbf16>, vector<128x128xbf16>, vector<1x128xf32> -> vector<1x128xf32>
    %c0_110 = arith.constant 0 : index
    %c0_111 = arith.constant 0 : index
    %159 = vector.load %arg17[%c0_110, %c0_111] : memref<1x128xf32, #tpu.memory_space<vmem>>, vector<1x128xf32>
    %160 = arith.addf %158, %159 : vector<1x128xf32>
    %cst_112 = arith.constant 0.000000e+00 : f32
    %161 = vector.broadcast %cst_112 : f32 to vector<1x128xf32>
    %162 = arith.maximumf %160, %161 : vector<1x128xf32>
    %c0_113 = arith.constant 0 : index
    %c0_114 = arith.constant 0 : index
    %163 = vector.load %arg18[%c0_113, %c0_114] : memref<128x4xbf16, #tpu.memory_space<vmem>>, vector<128x4xbf16>
    %164 = arith.truncf %162 : vector<1x128xf32> to vector<1x128xbf16>
    %cst_115 = arith.constant dense<0.000000e+00> : vector<1x4xf32>
    %165 = tpu.matmul %164, %163, %cst_115 {dimension_numbers = #tpu.dot_dimension_numbers<[1], [0], [0], [1], [0, 0, 1, 1], [], []>} : vector<1x128xbf16>, vector<128x4xbf16>, vector<1x4xf32> -> vector<1x4xf32>
    %c0_116 = arith.constant 0 : index
    %c0_117 = arith.constant 0 : index
    %166 = vector.load %arg19[%c0_116, %c0_117] : memref<1x4xf32, #tpu.memory_space<vmem>>, vector<1x4xf32>
    %167 = arith.addf %165, %166 : vector<1x4xf32>
    %c0_118 = arith.constant 0 : index
    %c0_119 = arith.constant 0 : index
    %168 = vector.load %arg20[%c0_118, %c0_119] : memref<1x4xf32, #tpu.memory_space<vmem>>, vector<1x4xf32>
    tpu.vector_store %arg20[%c0_118, %c0_119], %167 {strides = array<i32>} : memref<1x4xf32, #tpu.memory_space<vmem>>, vector<1x4xf32>,
    return
  }
}

</mosaic_0001>

<llo_original>
// kernel: gated_gcn_forward.1
$region0: #{gated_gcn_forward.1}
  #allocation0 [shape = 'u32[]', space=smem, size = 0x4, offset = 0x4, fixed_abs, tag = 'smem constant byte address 0x4 - core index']
  #allocation1 [shape = 'u32[144,128]{1,0:T(1,128)}', space=vmem, size = 0x12000, scoped, tag = 'internal scratch']
  #allocation2 [shape = 'f32[16,512]{1,0:T(8,128)}', space=vmem, size = 0x8000, scoped, tag = 'scratch operand']
  #allocation3 [shape = 'f32[32,128]{1,0:T(8,128)}', space=vmem, size = 0x4000, scoped, tag = 'scratch operand']
  #allocation4 [shape = 'f32[32,128]{1,0:T(8,128)}', space=vmem, size = 0x4000, scoped, tag = 'scratch operand']
  #allocation5 [shape = 'f32[16,128]{1,0:T(8,128)}', space=vmem, size = 0x2000, scoped, tag = 'scratch operand']
  #allocation6 [shape = 'f32[16,128]{1,0:T(8,128)}', space=vmem, size = 0x2000, scoped, tag = 'scratch operand']
  %s0 = inlined_call_operand.vmem [shape: s32[32], index: 0, kind: input, shape index: {}]
  %s1 = inlined_call_operand.vmem [shape: s32[32], index: 1, kind: input, shape index: {}]
  %s2 = inlined_call_operand.vmem [shape: f32[16,128], index: 2, kind: input, shape index: {}]
  %s3 = inlined_call_operand.vmem [shape: f32[32,1], index: 3, kind: input, shape index: {}]
  %s4 = inlined_call_operand.vmem [shape: f32[16,1], index: 4, kind: input, shape index: {}]
  %s5 = inlined_call_operand.vmem [shape: f32[32,1], index: 5, kind: input, shape index: {}]
  %s6 = inlined_call_operand.vmem [shape: bf16[128,128], index: 6, kind: input, shape index: {}]
  %s7 = inlined_call_operand.vmem [shape: f32[1,128], index: 7, kind: input, shape index: {}]
  %s8 = inlined_call_operand.vmem [shape: f32[1,128], index: 8, kind: input, shape index: {}]
  %s9 = inlined_call_operand.vmem [shape: f32[1,128], index: 9, kind: input, shape index: {}]
  %s10 = inlined_call_operand.vmem [shape: bf16[2,128,512], index: 10, kind: input, shape index: {}]
  %s11 = inlined_call_operand.vmem [shape: f32[2,1,512], index: 11, kind: input, shape index: {}]
  %s12 = inlined_call_operand.vmem [shape: bf16[2,128,128], index: 12, kind: input, shape index: {}]
  %s13 = inlined_call_operand.vmem [shape: f32[2,1,128], index: 13, kind: input, shape index: {}]
  %s14 = inlined_call_operand.vmem [shape: bf16[128,128], index: 14, kind: input, shape index: {}]
  %s15 = inlined_call_operand.vmem [shape: f32[1,128], index: 15, kind: input, shape index: {}]
  %s16 = inlined_call_operand.vmem [shape: bf16[128,128], index: 16, kind: input, shape index: {}]
  %s17 = inlined_call_operand.vmem [shape: f32[1,128], index: 17, kind: input, shape index: {}]
  %s18 = inlined_call_operand.vmem [shape: bf16[128,4], index: 18, kind: input, shape index: {}]
  %s19 = inlined_call_operand.vmem [shape: f32[1,4], index: 19, kind: input, shape index: {}]
  %s20 = inlined_call_operand.hbm [shape: f32[1,4], index: 20, kind: output, shape index: {}]
  %s21 = sld [smem:[#allocation0]]
  $region112: #{gated_gcn_forward.1} parent=0
    _
  %s23 = ssub.s32 1, %s21
  %s24 = scalar_select 0, %s23, %s21
  $region1: #{gated_gcn_forward.1} parent=0
    #allocation7 [shape = 'u8[512]{0}', space=smem, size = 0x200, scoped, tag = 'input window, operand 0, single buffered']
    #allocation8 [shape = 's32[1]{0}', space=sflag, size = 0x4, scoped, tag = 'scoped memory for gated_gcn_forward.1']
    #allocation9 [shape = 's32[1]{0}', space=sflag, size = 0x4, scoped, tag = 'scoped memory for gated_gcn_forward.1']
    #allocation10 [shape = 'u8[512]{0}', space=smem, size = 0x200, scoped, tag = 'input window, operand 1, single buffered']
    #allocation11 [shape = 's32[1]{0}', space=sflag, size = 0x4, scoped, tag = 'scoped memory for gated_gcn_forward.1']
    #allocation12 [shape = 'u8[512]{0}', space=vmem, size = 0x400, scoped, tag = 'output window, operand 0, single buffered']
    %25 = vsyncpa [#allocation9], 0
    %26 = vsyncpa [#allocation11], 0
    %27 = vsyncpa [#allocation8], 0
    // Predicated region
    $region2: #{gated_gcn_forward.1} parent=1 // pred_check
      _
    $region3: #{gated_gcn_forward.1} parent=1 // pred_check_branch
      %29 = sbr.rel (0) target = $region5
    $region4: #{gated_gcn_forward.1} parent=1 // pred_region
      %s31 = ssub.s32 16, 16
      %32 = vsyncadd [#allocation9], %s31
      %s34 = sshll.u32 %s0, 4
      %s35 = int_to_ptr.vmem [resolvable:$true] %s34
      %37 = dma.vmem_to_smem %s35, 16, [#allocation7], [#allocation9]
    $region5: #{gated_gcn_forward.1} parent=1 // pred_fallthru
      _
    // Predicated region
    $region6: #{gated_gcn_forward.1} parent=1 // pred_check
      _
    $region7: #{gated_gcn_forward.1} parent=1 // pred_check_branch
      %39 = sbr.rel (0) target = $region9
    $region8: #{gated_gcn_forward.1} parent=1 // pred_region
      %s41 = ssub.s32 16, 16
      %42 = vsyncadd [#allocation11], %s41
      %s44 = sshll.u32 %s1, 4
      %s45 = int_to_ptr.vmem [resolvable:$true] %s44
      %47 = dma.vmem_to_smem %s45, 16, [#allocation10], [#allocation11]
    $region9: #{gated_gcn_forward.1} parent=1 // pred_fallthru
      _
    // Predicated region
    $region10: #{gated_gcn_forward.1} parent=1 // pred_check
      _
    $region11: #{gated_gcn_forward.1} parent=1 // pred_check_branch
      %49 = sbr.rel (0) target = $region13
    $region12: #{gated_gcn_forward.1} parent=1 // pred_region
      _
    $region13: #{gated_gcn_forward.1} parent=1 // pred_fallthru
      _
    // Predicated region
    $region14: #{gated_gcn_forward.1} parent=1 // pred_check
      _
    $region15: #{gated_gcn_forward.1} parent=1 // pred_check_branch
      %51 = sbr.rel (0) target = $region17
    $region16: #{gated_gcn_forward.1} parent=1 // pred_region
      _
    $region17: #{gated_gcn_forward.1} parent=1 // pred_fallthru
      _
    // Predicated region
    $region18: #{gated_gcn_forward.1} parent=1 // pred_check
      _
    $region19: #{gated_gcn_forward.1} parent=1 // pred_check_branch
      %53 = sbr.rel (0) target = $region21
    $region20: #{gated_gcn_forward.1} parent=1 // pred_region
      _
    $region21: #{gated_gcn_forward.1} parent=1 // pred_fallthru
      _
    // Predicated region
    $region22: #{gated_gcn_forward.1} parent=1 // pred_check
      _
    $region23: #{gated_gcn_forward.1} parent=1 // pred_check_branch
      %55 = sbr.rel (0) target = $region25
    $region24: #{gated_gcn_forward.1} parent=1 // pred_region
      _
    $region25: #{gated_gcn_forward.1} parent=1 // pred_fallthru
      _
    // Predicated region
    $region26: #{gated_gcn_forward.1} parent=1 // pred_check
      _
    $region27: #{gated_gcn_forward.1} parent=1 // pred_check_branch
      %57 = sbr.rel (0) target = $region29
    $region28: #{gated_gcn_forward.1} parent=1 // pred_region
      _
    $region29: #{gated_gcn_forward.1} parent=1 // pred_fallthru
      _
    // Predicated region
    $region30: #{gated_gcn_forward.1} parent=1 // pred_check
      _
    $region31: #{gated_gcn_forward.1} parent=1 // pred_check_branch
      %59 = sbr.rel (0) target = $region33
    $region32: #{gated_gcn_forward.1} parent=1 // pred_region
      _
    $region33: #{gated_gcn_forward.1} parent=1 // pred_fallthru
      _
    // Predicated region
    $region34: #{gated_gcn_forward.1} parent=1 // pred_check
      _
    $region35: #{gated_gcn_forward.1} parent=1 // pred_check_branch
      %61 = sbr.rel (0) target = $region37
    $region36: #{gated_gcn_forward.1} parent=1 // pred_region
      _
    $region37: #{gated_gcn_forward.1} parent=1 // pred_fallthru
      _
    // Predicated region
    $region38: #{gated_gcn_forward.1} parent=1 // pred_check
      _
    $region39: #{gated_gcn_forward.1} parent=1 // pred_check_branch
      %63 = sbr.rel (0) target = $region41
    $region40: #{gated_gcn_forward.1} parent=1 // pred_region
      _
    $region41: #{gated_gcn_forward.1} parent=1 // pred_fallthru
      _
    // Predicated region
    $region42: #{gated_gcn_forward.1} parent=1 // pred_check
      _
    $region43: #{gated_gcn_forward.1} parent=1 // pred_check_branch
      %65 = sbr.rel (0) target = $region45
    $region44: #{gated_gcn_forward.1} parent=1 // pred_region
      _
    $region45: #{gated_gcn_forward.1} parent=1 // pred_fallthru
      _
    // Predicated region
    $region46: #{gated_gcn_forward.1} parent=1 // pred_check
      _
    $region47: #{gated_gcn_forward.1} parent=1 // pred_check_branch
      %67 = sbr.rel (0) target = $region49
    $region48: #{gated_gcn_forward.1} parent=1 // pred_region
      _
    $region49: #{gated_gcn_forward.1} parent=1 // pred_fallthru
      _
    // Predicated region
    $region50: #{gated_gcn_forward.1} parent=1 // pred_check
      _
    $region51: #{gated_gcn_forward.1} parent=1 // pred_check_branch
      %69 = sbr.rel (0) target = $region53
    $region52: #{gated_gcn_forward.1} parent=1 // pred_region
      _
    $region53: #{gated_gcn_forward.1} parent=1 // pred_fallthru
      _
    // Predicated region
    $region54: #{gated_gcn_forward.1} parent=1 // pred_check
      _
    $region55: #{gated_gcn_forward.1} parent=1 // pred_check_branch
      %71 = sbr.rel (0) target = $region57
    $region56: #{gated_gcn_forward.1} parent=1 // pred_region
      _
    $region57: #{gated_gcn_forward.1} parent=1 // pred_fallthru
      _
    // Predicated region
    $region58: #{gated_gcn_forward.1} parent=1 // pred_check
      _
    $region59: #{gated_gcn_forward.1} parent=1 // pred_check_branch
      %73 = sbr.rel (0) target = $region61
    $region60: #{gated_gcn_forward.1} parent=1 // pred_region
      _
    $region61: #{gated_gcn_forward.1} parent=1 // pred_fallthru
      _
    // Predicated region
    $region62: #{gated_gcn_forward.1} parent=1 // pred_check
      _
    $region63: #{gated_gcn_forward.1} parent=1 // pred_check_branch
      %75 = sbr.rel (0) target = $region65
    $region64: #{gated_gcn_forward.1} parent=1 // pred_region
      _
    $region65: #{gated_gcn_forward.1} parent=1 // pred_fallthru
      _
    // Predicated region
    $region66: #{gated_gcn_forward.1} parent=1 // pred_check
      _
    $region67: #{gated_gcn_forward.1} parent=1 // pred_check_branch
      %77 = sbr.rel (0) target = $region69
    $region68: #{gated_gcn_forward.1} parent=1 // pred_region
      _
    $region69: #{gated_gcn_forward.1} parent=1 // pred_fallthru
      _
    // Predicated region
    $region70: #{gated_gcn_forward.1} parent=1 // pred_check
      _
    $region71: #{gated_gcn_forward.1} parent=1 // pred_check_branch
      %79 = sbr.rel (0) target = $region73
    $region72: #{gated_gcn_forward.1} parent=1 // pred_region
      _
    $region73: #{gated_gcn_forward.1} parent=1 // pred_fallthru
      _
    // Predicated region
    $region74: #{gated_gcn_forward.1} parent=1 // pred_check
      _
    $region75: #{gated_gcn_forward.1} parent=1 // pred_check_branch
      %81 = sbr.rel (0) target = $region77
    $region76: #{gated_gcn_forward.1} parent=1 // pred_region
      _
    $region77: #{gated_gcn_forward.1} parent=1 // pred_fallthru
      _
    // Predicated region
    $region78: #{gated_gcn_forward.1} parent=1 // pred_check
      _
    $region79: #{gated_gcn_forward.1} parent=1 // pred_check_branch
      %83 = sbr.rel (0) target = $region81
    $region80: #{gated_gcn_forward.1} parent=1 // pred_region
      _
    $region81: #{gated_gcn_forward.1} parent=1 // pred_fallthru
      _
    // Predicated region
    $region82: #{gated_gcn_forward.1} parent=1 // pred_check
      _
    $region83: #{gated_gcn_forward.1} parent=1 // pred_check_branch
      %85 = sbr.rel (0) target = $region85
    $region84: #{gated_gcn_forward.1} parent=1 // pred_region
      %86 = dma.done [#allocation9], 16
    $region85: #{gated_gcn_forward.1} parent=1 // pred_fallthru
      _
    // Predicated region
    $region86: #{gated_gcn_forward.1} parent=1 // pred_check
      _
    $region87: #{gated_gcn_forward.1} parent=1 // pred_check_branch
      %88 = sbr.rel (0) target = $region89
    $region88: #{gated_gcn_forward.1} parent=1 // pred_region
      %89 = dma.done [#allocation11], 16
    $region89: #{gated_gcn_forward.1} parent=1 // pred_fallthru
      _
    %90 = sfence
    %v92 = vld [vmem:[%s2] sm:$0xff]
    %v93 = vld [vmem:[%s2 + $0x8] sm:$0xff]
    %v94 = vld [vmem:[%s6] sm:$0xf]
    %v95 = vld [vmem:[%s6 + $0x4] sm:$0xf]
    %v96 = vld [vmem:[%s6 + $0x8] sm:$0xf]
    %v97 = vld [vmem:[%s6 + $0xc] sm:$0xf]
    %v98 = vld [vmem:[%s6 + $0x10] sm:$0xf]
    %v99 = vld [vmem:[%s6 + $0x14] sm:$0xf]
    %v100 = vld [vmem:[%s6 + $0x18] sm:$0xf]
    %v101 = vld [vmem:[%s6 + $0x1c] sm:$0xf]
    %v102 = vld [vmem:[%s6 + $0x20] sm:$0xf]
    %v103 = vld [vmem:[%s6 + $0x24] sm:$0xf]
    %v104 = vld [vmem:[%s6 + $0x28] sm:$0xf]
    %v105 = vld [vmem:[%s6 + $0x2c] sm:$0xf]
    %v106 = vld [vmem:[%s6 + $0x30] sm:$0xf]
    %v107 = vld [vmem:[%s6 + $0x34] sm:$0xf]
    %v108 = vld [vmem:[%s6 + $0x38] sm:$0xf]
    %v109 = vld [vmem:[%s6 + $0x3c] sm:$0xf]
    %v110 = vpack.c.bf16 %v93, %v92
    %v111 = vld [vmem:[%s7] sm:$0x1]
    %v113 = vlaneseq
    %v114 = vshrl.u32 %v113, 7
    %v115 = vsub.s32 0, %v114
    %v116 = vrot.slane %v111, %v115
    %v134 = vunpack.c.l.b16 %v94
    %v135 = vunpack.c.l.b16 %v95
    %v136 = vunpack.c.l.b16 %v96
    %v137 = vunpack.c.l.b16 %v97
    %v138 = vunpack.c.l.b16 %v98
    %v139 = vunpack.c.l.b16 %v99
    %v140 = vunpack.c.l.b16 %v100
    %v141 = vunpack.c.l.b16 %v101
    %v142 = vunpack.c.l.b16 %v102
    %v143 = vunpack.c.l.b16 %v103
    %v144 = vunpack.c.l.b16 %v104
    %v145 = vunpack.c.l.b16 %v105
    %v146 = vunpack.c.l.b16 %v106
    %v147 = vunpack.c.l.b16 %v107
    %v148 = vunpack.c.l.b16 %v108
    %v149 = vunpack.c.l.b16 %v109
    %v150 = vpack.c.b16 %v135, %v134
    %v151 = vpack.c.b16 %v137, %v136
    %v152 = vpack.c.b16 %v139, %v138
    %v153 = vpack.c.b16 %v141, %v140
    %v154 = vpack.c.b16 %v143, %v142
    %v155 = vpack.c.b16 %v145, %v144
    %v156 = vpack.c.b16 %v147, %v146
    %v157 = vpack.c.b16 %v149, %v148
    %166 = vmatprep.subr.bf16.mxu0 0
    %167 = vmatpush1.bf16.msra.mxu0 %v150
    %168 = vmatprep.subr.bf16.mxu0 0
    %169 = vmatpush1.bf16.msra.mxu0 %v151
    %170 = vmatprep.subr.bf16.mxu0 0
    %171 = vmatpush1.bf16.msra.mxu0 %v152
    %172 = vmatprep.subr.bf16.mxu0 0
    %173 = vmatpush1.bf16.msra.mxu0 %v153
    %174 = vmatprep.subr.bf16.mxu0 0
    %175 = vmatpush1.bf16.msra.mxu0 %v154
    %176 = vmatprep.subr.bf16.mxu0 0
    %177 = vmatpush1.bf16.msra.mxu0 %v155
    %178 = vmatprep.subr.bf16.mxu0 0
    %179 = vmatpush1.bf16.msra.mxu0 %v156
    %180 = vmatprep.subr.bf16.mxu0 0
    %181 = vmatpush1.bf16.msra.mxu0 %v157
    %182 = vmatprep.subr.bf16.mxu0 0
    %183 = vmatpush1.bf16.msra.mxu0 0
    %184 = vmatprep.subr.bf16.mxu0 0
    %185 = vmatpush1.bf16.msra.mxu0 0
    %186 = vmatprep.subr.bf16.mxu0 0
    %187 = vmatpush1.bf16.msra.mxu0 0
    %188 = vmatprep.subr.bf16.mxu0 0
    %189 = vmatpush1.bf16.msra.mxu0 0
    %190 = vmatprep.subr.bf16.mxu0 0
    %191 = vmatpush1.bf16.msra.mxu0 0
    %192 = vmatprep.subr.bf16.mxu0 0
    %193 = vmatpush1.bf16.msra.mxu0 0
    %194 = vmatprep.subr.bf16.mxu0 0
    %195 = vmatpush1.bf16.msra.mxu0 0
    %196 = vmatprep.subr.bf16.mxu0 0
    %197 = vmatpush1.bf16.msra.mxu0 0
    %198 = vmatprep.mubr.bf16.mxu0 0
    %199 = vmatmul.mubr.bf16.gmra.mrb[0].mxu0 %v110
    %v200 = vpop.f32.mrb[0].mxu0
    %v201 = vadd.f32 %v116, %v200
    %v202 = vpop.f32.mrb[0].mxu0
    %v203 = vpop.f32.mrb[0].mxu0
    %v204 = vadd.f32 %v116, %v203
    %v205 = vpop.f32.mrb[0].mxu0
    %206 = vdwg.mxu0
    %v207 = vld [vmem:[%s3] sm:$0xff]
    %v208 = vld [vmem:[%s3 + $0x8] sm:$0xff]
    %v209 = vld [vmem:[%s3 + $0x10] sm:$0xff]
    %v210 = vld [vmem:[%s3 + $0x18] sm:$0xff]
    %v211 = vld [vmem:[%s8] sm:$0x1]
    %213 = vset.pattern.permute.xlu0 0
    %214 = vperm.xlu0 %213, %v207
    %v215 = vpop.permute.xlu0 %214
    %218 = vset.pattern.permute.xlu0 0
    %219 = vperm.xlu0 %218, %v208
    %v220 = vpop.permute.xlu0 %219
    %223 = vset.pattern.permute.xlu0 0
    %224 = vperm.xlu0 %223, %v209
    %v225 = vpop.permute.xlu0 %224
    %228 = vset.pattern.permute.xlu0 0
    %229 = vperm.xlu0 %228, %v210
    %v230 = vpop.permute.xlu0 %229
    %v233 = vlaneseq
    %v234 = vshrl.u32 %v233, 7
    %v235 = vsub.s32 0, %v234
    %v236 = vrot.slane %v211, %v235
    %v238 = vmul.f32 %v215, %v236
    %v239 = vmul.f32 %v220, %v236
    %v240 = vmul.f32 %v225, %v236
    %v241 = vmul.f32 %v230, %v236
    %v242 = vld [vmem:[%s9] sm:$0x1]
    %v244 = vlaneseq
    %v245 = vshrl.u32 %v244, 7
    %v246 = vsub.s32 0, %v245
    %v247 = vrot.slane %v242, %v246
    %v249 = vadd.f32 %v238, %v247
    %v250 = vadd.f32 %v239, %v247
    %v251 = vadd.f32 %v240, %v247
    %v252 = vadd.f32 %v241, %v247
    %v253 = vld [vmem:[%s4] sm:$0xff]
    %v254 = vld [vmem:[%s4 + $0x8] sm:$0xff]
    %v255 = vld [vmem:[%s5] sm:$0xff]
    %v256 = vld [vmem:[%s5 + $0x8] sm:$0xff]
    %v257 = vld [vmem:[%s5 + $0x10] sm:$0xff]
    %v258 = vld [vmem:[%s5 + $0x18] sm:$0xff]
    %v259 = vld [vmem:[%s10] sm:$0xff]
    %v260 = vld [vmem:[%s10 + $0x8] sm:$0xff]
    %v261 = vld [vmem:[%s10 + $0x10] sm:$0xff]
    %v262 = vld [vmem:[%s10 + $0x18] sm:$0xff]
    %v263 = vld [vmem:[%s10 + $0x20] sm:$0xff]
    %v264 = vld [vmem:[%s10 + $0x28] sm:$0xff]
    %v265 = vld [vmem:[%s10 + $0x30] sm:$0xff]
    %v266 = vld [vmem:[%s10 + $0x38] sm:$0xff]
    %v267 = vld [vmem:[%s10 + $0x40] sm:$0xff]
    %v268 = vld [vmem:[%s10 + $0x48] sm:$0xff]
    %v269 = vld [vmem:[%s10 + $0x50] sm:$0xff]
    %v270 = vld [vmem:[%s10 + $0x58] sm:$0xff]
    %v271 = vld [vmem:[%s10 + $0x60] sm:$0xff]
    %v272 = vld [vmem:[%s10 + $0x68] sm:$0xff]
    %v273 = vld [vmem:[%s10 + $0x70] sm:$0xff]
    %v274 = vld [vmem:[%s10 + $0x78] sm:$0xff]
    %v275 = vld [vmem:[%s10 + $0x80] sm:$0xff]
    %v276 = vld [vmem:[%s10 + $0x88] sm:$0xff]
    %v277 = vld [vmem:[%s10 + $0x90] sm:$0xff]
    %v278 = vld [vmem:[%s10 + $0x98] sm:$0xff]
    %v279 = vld [vmem:[%s10 + $0xa0] sm:$0xff]
    %v280 = vld [vmem:[%s10 + $0xa8] sm:$0xff]
    %v281 = vld [vmem:[%s10 + $0xb0] sm:$0xff]
    %v282 = vld [vmem:[%s10 + $0xb8] sm:$0xff]
    %v283 = vld [vmem:[%s10 + $0xc0] sm:$0xff]
    %v284 = vld [vmem:[%s10 + $0xc8] sm:$0xff]
    %v285 = vld [vmem:[%s10 + $0xd0] sm:$0xff]
    %v286 = vld [vmem:[%s10 + $0xd8] sm:$0xff]
    %v287 = vld [vmem:[%s10 + $0xe0] sm:$0xff]
    %v288 = vld [vmem:[%s10 + $0xe8] sm:$0xff]
    %v289 = vld [vmem:[%s10 + $0xf0] sm:$0xff]
    %v290 = vld [vmem:[%s10 + $0xf8] sm:$0xff]
    %v291 = vpack.c.bf16 %v204, %v201
    %v292 = vld [vmem:[%s11] sm:$0xf]
    %v294 = vlaneseq
    %v295 = vshrl.u32 %v294, 7
    %v296 = vsub.s32 0, %v295
    %v297 = vrot.slane %v292, %v296
    %v298 = vlaneseq
    %v299 = vshrl.u32 %v298, 7
    %v300 = vsub.s32 1, %v299
    %v301 = vrot.slane %v292, %v300
    %v302 = vlaneseq
    %v303 = vshrl.u32 %v302, 7
    %v304 = vsub.s32 2, %v303
    %v305 = vrot.slane %v292, %v304
    %v306 = vlaneseq
    %v307 = vshrl.u32 %v306, 7
    %v308 = vsub.s32 3, %v307
    %v309 = vrot.slane %v292, %v308
    %v346 = vunpack.c.l.b16 %v259
    %v347 = vunpack.c.h.b16 %v259
    %v348 = vunpack.c.l.b16 %v260
    %v349 = vunpack.c.h.b16 %v260
    %v350 = vunpack.c.l.b16 %v261
    %v351 = vunpack.c.h.b16 %v261
    %v352 = vunpack.c.l.b16 %v262
    %v353 = vunpack.c.h.b16 %v262
    %v354 = vunpack.c.l.b16 %v263
    %v355 = vunpack.c.h.b16 %v263
    %v356 = vunpack.c.l.b16 %v264
    %v357 = vunpack.c.h.b16 %v264
    %v358 = vunpack.c.l.b16 %v265
    %v359 = vunpack.c.h.b16 %v265
    %v360 = vunpack.c.l.b16 %v266
    %v361 = vunpack.c.h.b16 %v266
    %v362 = vunpack.c.l.b16 %v267
    %v363 = vunpack.c.h.b16 %v267
    %v364 = vunpack.c.l.b16 %v268
    %v365 = vunpack.c.h.b16 %v268
    %v366 = vunpack.c.l.b16 %v269
    %v367 = vunpack.c.h.b16 %v269
    %v368 = vunpack.c.l.b16 %v270
    %v369 = vunpack.c.h.b16 %v270
    %v370 = vunpack.c.l.b16 %v271
    %v371 = vunpack.c.h.b16 %v271
    %v372 = vunpack.c.l.b16 %v272
    %v373 = vunpack.c.h.b16 %v272
    %v374 = vunpack.c.l.b16 %v273
    %v375 = vunpack.c.h.b16 %v273
    %v376 = vunpack.c.l.b16 %v274
    %v377 = vunpack.c.h.b16 %v274
    %v378 = vunpack.c.l.b16 %v275
    %v379 = vunpack.c.h.b16 %v275
    %v380 = vunpack.c.l.b16 %v276
    %v381 = vunpack.c.h.b16 %v276
    %v382 = vunpack.c.l.b16 %v277
    %v383 = vunpack.c.h.b16 %v277
    %v384 = vunpack.c.l.b16 %v278
    %v385 = vunpack.c.h.b16 %v278
    %v386 = vunpack.c.l.b16 %v279
    %v387 = vunpack.c.h.b16 %v279
    %v388 = vunpack.c.l.b16 %v280
    %v389 = vunpack.c.h.b16 %v280
    %v390 = vunpack.c.l.b16 %v281
    %v391 = vunpack.c.h.b16 %v281
    %v392 = vunpack.c.l.b16 %v282
    %v393 = vunpack.c.h.b16 %v282
    %v394 = vunpack.c.l.b16 %v283
    %v395 = vunpack.c.h.b16 %v283
    %v396 = vunpack.c.l.b16 %v284
    %v397 = vunpack.c.h.b16 %v284
    %v398 = vunpack.c.l.b16 %v285
    %v399 = vunpack.c.h.b16 %v285
    %v400 = vunpack.c.l.b16 %v286
    %v401 = vunpack.c.h.b16 %v286
    %v402 = vunpack.c.l.b16 %v287
    %v403 = vunpack.c.h.b16 %v287
    %v404 = vunpack.c.l.b16 %v288
    %v405 = vunpack.c.h.b16 %v288
    %v406 = vunpack.c.l.b16 %v289
    %v407 = vunpack.c.h.b16 %v289
    %v408 = vunpack.c.l.b16 %v290
    %v409 = vunpack.c.h.b16 %v290
    %v410 = vpack.c.b16 %v350, %v346
    %v411 = vpack.c.b16 %v351, %v347
    %v412 = vpack.c.b16 %v352, %v348
    %v413 = vpack.c.b16 %v353, %v349
    %v414 = vpack.c.b16 %v358, %v354
    %v415 = vpack.c.b16 %v359, %v355
    %v416 = vpack.c.b16 %v360, %v356
    %v417 = vpack.c.b16 %v361, %v357
    %v418 = vpack.c.b16 %v366, %v362
    %v419 = vpack.c.b16 %v367, %v363
    %v420 = vpack.c.b16 %v368, %v364
    %v421 = vpack.c.b16 %v369, %v365
    %v422 = vpack.c.b16 %v374, %v370
    %v423 = vpack.c.b16 %v375, %v371
    %v424 = vpack.c.b16 %v376, %v372
    %v425 = vpack.c.b16 %v377, %v373
    %v426 = vpack.c.b16 %v382, %v378
    %v427 = vpack.c.b16 %v383, %v379
    %v428 = vpack.c.b16 %v384, %v380
    %v429 = vpack.c.b16 %v385, %v381
    %v430 = vpack.c.b16 %v390, %v386
    %v431 = vpack.c.b16 %v391, %v387
    %v432 = vpack.c.b16 %v392, %v388
    %v433 = vpack.c.b16 %v393, %v389
    %v434 = vpack.c.b16 %v398, %v394
    %v435 = vpack.c.b16 %v399, %v395
    %v436 = vpack.c.b16 %v400, %v396
    %v437 = vpack.c.b16 %v401, %v397
    %v438 = vpack.c.b16 %v406, %v402
    %v439 = vpack.c.b16 %v407, %v403
    %v440 = vpack.c.b16 %v408, %v404
    %v441 = vpack.c.b16 %v409, %v405
    %474 = vmatprep.subr.bf16.mxu0 %v411
    %475 = vmatpush1.bf16.msra.mxu0 %v410
    %476 = vmatprep.subr.bf16.mxu0 %v415
    %477 = vmatpush1.bf16.msra.mxu0 %v414
    %478 = vmatprep.subr.bf16.mxu0 %v419
    %479 = vmatpush1.bf16.msra.mxu0 %v418
    %480 = vmatprep.subr.bf16.mxu0 %v423
    %481 = vmatpush1.bf16.msra.mxu0 %v422
    %482 = vmatprep.subr.bf16.mxu0 %v427
    %483 = vmatpush1.bf16.msra.mxu0 %v426
    %484 = vmatprep.subr.bf16.mxu0 %v431
    %485 = vmatpush1.bf16.msra.mxu0 %v430
    %486 = vmatprep.subr.bf16.mxu0 %v435
    %487 = vmatpush1.bf16.msra.mxu0 %v434
    %488 = vmatprep.subr.bf16.mxu0 %v439
    %489 = vmatpush1.bf16.msra.mxu0 %v438
    %490 = vmatprep.subr.bf16.mxu0 0
    %491 = vmatpush1.bf16.msra.mxu0 0
    %492 = vmatprep.subr.bf16.mxu0 0
    %493 = vmatpush1.bf16.msra.mxu0 0
    %494 = vmatprep.subr.bf16.mxu0 0
    %495 = vmatpush1.bf16.msra.mxu0 0
    %496 = vmatprep.subr.bf16.mxu0 0
    %497 = vmatpush1.bf16.msra.mxu0 0
    %498 = vmatprep.subr.bf16.mxu0 0
    %499 = vmatpush1.bf16.msra.mxu0 0
    %500 = vmatprep.subr.bf16.mxu0 0
    %501 = vmatpush1.bf16.msra.mxu0 0
    %502 = vmatprep.subr.bf16.mxu0 0
    %503 = vmatpush1.bf16.msra.mxu0 0
    %504 = vmatprep.subr.bf16.mxu0 0
    %505 = vmatpush1.bf16.msra.mxu0 0
    %506 = vmatprep.mubr.bf16.mxu0 0
    %507 = vmatmul.mubr.bf16.gmra.mrb[0].mxu0 %v291
    %v508 = vpop.f32.mrb[0].mxu0
    %v509 = vadd.f32 %v297, %v508
    %v510 = vpop.f32.mrb[0].mxu0
    %v511 = vadd.f32 %v301, %v510
    %v512 = vpop.f32.mrb[0].mxu0
    %v513 = vadd.f32 %v297, %v512
    %v514 = vpop.f32.mrb[0].mxu0
    %v515 = vadd.f32 %v301, %v514
    %516 = vdwg.mxu0
    %517 = vmatprep.subr.bf16.mxu0 %v413
    %518 = vmatpush1.bf16.msra.mxu0 %v412
    %519 = vmatprep.subr.bf16.mxu0 %v417
    %520 = vmatpush1.bf16.msra.mxu0 %v416
    %521 = vmatprep.subr.bf16.mxu0 %v421
    %522 = vmatpush1.bf16.msra.mxu0 %v420
    %523 = vmatprep.subr.bf16.mxu0 %v425
    %524 = vmatpush1.bf16.msra.mxu0 %v424
    %525 = vmatprep.subr.bf16.mxu0 %v429
    %526 = vmatpush1.bf16.msra.mxu0 %v428
    %527 = vmatprep.subr.bf16.mxu0 %v433
    %528 = vmatpush1.bf16.msra.mxu0 %v432
    %529 = vmatprep.subr.bf16.mxu0 %v437
    %530 = vmatpush1.bf16.msra.mxu0 %v436
    %531 = vmatprep.subr.bf16.mxu0 %v441
    %532 = vmatpush1.bf16.msra.mxu0 %v440
    %533 = vmatprep.subr.bf16.mxu0 0
    %534 = vmatpush1.bf16.msra.mxu0 0
    %535 = vmatprep.subr.bf16.mxu0 0
    %536 = vmatpush1.bf16.msra.mxu0 0
    %537 = vmatprep.subr.bf16.mxu0 0
    %538 = vmatpush1.bf16.msra.mxu0 0
    %539 = vmatprep.subr.bf16.mxu0 0
    %540 = vmatpush1.bf16.msra.mxu0 0
    %541 = vmatprep.subr.bf16.mxu0 0
    %542 = vmatpush1.bf16.msra.mxu0 0
    %543 = vmatprep.subr.bf16.mxu0 0
    %544 = vmatpush1.bf16.msra.mxu0 0
    %545 = vmatprep.subr.bf16.mxu0 0
    %546 = vmatpush1.bf16.msra.mxu0 0
    %547 = vmatprep.subr.bf16.mxu0 0
    %548 = vmatpush1.bf16.msra.mxu0 0
    %549 = vmatprep.mubr.bf16.mxu0 0
    %550 = vmatmul.mubr.bf16.gmra.mrb[0].mxu0 %v291
    %v551 = vpop.f32.mrb[0].mxu0
    %v552 = vadd.f32 %v305, %v551
    %v553 = vpop.f32.mrb[0].mxu0
    %v554 = vadd.f32 %v309, %v553
    %v555 = vpop.f32.mrb[0].mxu0
    %v556 = vadd.f32 %v305, %v555
    %v557 = vpop.f32.mrb[0].mxu0
    %v558 = vadd.f32 %v309, %v557
    %559 = vdwg.mxu0
    %560 = vst [vmem:[#allocation2] sm:$0xff] %v509
    %561 = vst [vmem:[#allocation2 + $0x8] sm:$0xff] %v511
    %562 = vst [vmem:[#allocation2 + $0x10] sm:$0xff] %v552
    %563 = vst [vmem:[#allocation2 + $0x18] sm:$0xff] %v554
    %564 = vst [vmem:[#allocation2 + $0x20] sm:$0xff] %v513
    %565 = vst [vmem:[#allocation2 + $0x28] sm:$0xff] %v515
    %566 = vst [vmem:[#allocation2 + $0x30] sm:$0xff] %v556
    %567 = vst [vmem:[#allocation2 + $0x38] sm:$0xff] %v558
    %v568 = vld [vmem:[%s12] sm:$0xf]
    %v569 = vld [vmem:[%s12 + $0x4] sm:$0xf]
    %v570 = vld [vmem:[%s12 + $0x8] sm:$0xf]
    %v571 = vld [vmem:[%s12 + $0xc] sm:$0xf]
    %v572 = vld [vmem:[%s12 + $0x10] sm:$0xf]
    %v573 = vld [vmem:[%s12 + $0x14] sm:$0xf]
    %v574 = vld [vmem:[%s12 + $0x18] sm:$0xf]
    %v575 = vld [vmem:[%s12 + $0x1c] sm:$0xf]
    %v576 = vld [vmem:[%s12 + $0x20] sm:$0xf]
    %v577 = vld [vmem:[%s12 + $0x24] sm:$0xf]
    %v578 = vld [vmem:[%s12 + $0x28] sm:$0xf]
    %v579 = vld [vmem:[%s12 + $0x2c] sm:$0xf]
    %v580 = vld [vmem:[%s12 + $0x30] sm:$0xf]
    %v581 = vld [vmem:[%s12 + $0x34] sm:$0xf]
    %v582 = vld [vmem:[%s12 + $0x38] sm:$0xf]
    %v583 = vld [vmem:[%s12 + $0x3c] sm:$0xf]
    %v584 = vpack.c.bf16 %v250, %v249
    %v585 = vpack.c.bf16 %v252, %v251
    %v586 = vld [vmem:[%s13] sm:$0x1]
    %v588 = vlaneseq
    %v589 = vshrl.u32 %v588, 7
    %v590 = vsub.s32 0, %v589
    %v591 = vrot.slane %v586, %v590
    %v609 = vunpack.c.l.b16 %v568
    %v610 = vunpack.c.l.b16 %v569
    %v611 = vunpack.c.l.b16 %v570
    %v612 = vunpack.c.l.b16 %v571
    %v613 = vunpack.c.l.b16 %v572
    %v614 = vunpack.c.l.b16 %v573
    %v615 = vunpack.c.l.b16 %v574
    %v616 = vunpack.c.l.b16 %v575
    %v617 = vunpack.c.l.b16 %v576
    %v618 = vunpack.c.l.b16 %v577
    %v619 = vunpack.c.l.b16 %v578
    %v620 = vunpack.c.l.b16 %v579
    %v621 = vunpack.c.l.b16 %v580
    %v622 = vunpack.c.l.b16 %v581
    %v623 = vunpack.c.l.b16 %v582
    %v624 = vunpack.c.l.b16 %v583
    %v625 = vpack.c.b16 %v610, %v609
    %v626 = vpack.c.b16 %v612, %v611
    %v627 = vpack.c.b16 %v614, %v613
    %v628 = vpack.c.b16 %v616, %v615
    %v629 = vpack.c.b16 %v618, %v617
    %v630 = vpack.c.b16 %v620, %v619
    %v631 = vpack.c.b16 %v622, %v621
    %v632 = vpack.c.b16 %v624, %v623
    %641 = vmatprep.subr.bf16.mxu0 0
    %642 = vmatpush1.bf16.msra.mxu0 %v625
    %643 = vmatprep.subr.bf16.mxu0 0
    %644 = vmatpush1.bf16.msra.mxu0 %v626
    %645 = vmatprep.subr.bf16.mxu0 0
    %646 = vmatpush1.bf16.msra.mxu0 %v627
    %647 = vmatprep.subr.bf16.mxu0 0
    %648 = vmatpush1.bf16.msra.mxu0 %v628
    %649 = vmatprep.subr.bf16.mxu0 0
    %650 = vmatpush1.bf16.msra.mxu0 %v629
    %651 = vmatprep.subr.bf16.mxu0 0
    %652 = vmatpush1.bf16.msra.mxu0 %v630
    %653 = vmatprep.subr.bf16.mxu0 0
    %654 = vmatpush1.bf16.msra.mxu0 %v631
    %655 = vmatprep.subr.bf16.mxu0 0
    %656 = vmatpush1.bf16.msra.mxu0 %v632
    %657 = vmatprep.subr.bf16.mxu0 0
    %658 = vmatpush1.bf16.msra.mxu0 0
    %659 = vmatprep.subr.bf16.mxu0 0
    %660 = vmatpush1.bf16.msra.mxu0 0
    %661 = vmatprep.subr.bf16.mxu0 0
    %662 = vmatpush1.bf16.msra.mxu0 0
    %663 = vmatprep.subr.bf16.mxu0 0
    %664 = vmatpush1.bf16.msra.mxu0 0
    %665 = vmatprep.subr.bf16.mxu0 0
    %666 = vmatpush1.bf16.msra.mxu0 0
    %667 = vmatprep.subr.bf16.mxu0 0
    %668 = vmatpush1.bf16.msra.mxu0 0
    %669 = vmatprep.subr.bf16.mxu0 0
    %670 = vmatpush1.bf16.msra.mxu0 0
    %671 = vmatprep.subr.bf16.mxu0 0
    %672 = vmatpush1.bf16.msra.mxu0 0
    %673 = vmatprep.mubr.bf16.mxu0 0
    %674 = vmatmul.mubr.bf16.gmra.mrb[0].mxu0 %v584
    %v675 = vpop.f32.mrb[0].mxu0
    %v676 = vadd.f32 %v591, %v675
    %v677 = vpop.f32.mrb[0].mxu0
    %v678 = vpop.f32.mrb[0].mxu0
    %v679 = vadd.f32 %v591, %v678
    %v680 = vpop.f32.mrb[0].mxu0
    %681 = vmatprep.mubr.bf16.mxu0 0
    %682 = vmatmul.mubr.bf16.gmra.mrb[0].mxu0 %v585
    %v683 = vpop.f32.mrb[0].mxu0
    %v684 = vadd.f32 %v591, %v683
    %v685 = vpop.f32.mrb[0].mxu0
    %v686 = vpop.f32.mrb[0].mxu0
    %v687 = vadd.f32 %v591, %v686
    %v688 = vpop.f32.mrb[0].mxu0
    %689 = vdwg.mxu0
    %690 = vst [vmem:[#allocation3] sm:$0xff] %v676
    %691 = vst [vmem:[#allocation3 + $0x8] sm:$0xff] %v679
    %692 = vst [vmem:[#allocation3 + $0x10] sm:$0xff] %v684
    %693 = vst [vmem:[#allocation3 + $0x18] sm:$0xff] %v687
    %694 = vst [vmem:[#allocation5] sm:$0xff] 0.0
    %695 = vst [vmem:[#allocation5 + $0x8] sm:$0xff] 0.0
    %696 = vst [vmem:[#allocation6] sm:$0xff] 0.0
    %697 = vst [vmem:[#allocation6 + $0x8] sm:$0xff] 0.0
    loop: start=0, step=1, limit=32
    $region90: #{gated_gcn_forward.1} parent=1 // loop_pre_header
      _
    $region91: #{gated_gcn_forward.1} parent=1 // loop_header
      %s699 = sphi 0, %s703
      %p700 = scmp.ge.s32.totalorder %s699, 32
    $region92: #{gated_gcn_forward.1} parent=1 // loop_header_branch
      %702 = sbr.rel (%p700) target = $region96
    $region93: #{gated_gcn_forward.1} parent=1 // loop_body
      %s704 = sld [smem:[#allocation7 + %s699]]
      %s705 = sld [smem:[#allocation10 + %s699]]
      %s706 = sshra.s32 %s704, 3
      %s707 = sand.u32 %s704, 7
      %s708 = sshra.s32 %s704, 3
      %s709 = sand.u32 %s704, 7
      %s710 = smul.u32 %s706, 4
      %s711 = smul.u32 %s710, 8
      %s712 = sadd.s32 %s711, %s709
      %s713 = scalar_lea.vmem [#allocation2], %s712
      %v714 = vld [vmem:[%s713] ss:$8 sm:$0xf]
      %s715 = sshra.s32 %s705, 3
      %s716 = sand.u32 %s705, 7
      %s717 = sshra.s32 %s705, 3
      %s718 = sand.u32 %s705, 7
      %s719 = smul.u32 %s715, 4
      %s720 = smul.u32 %s719, 8
      %s721 = sadd.s32 %s720, %s718
      %s722 = scalar_lea.vmem [#allocation2], %s721
      %v723 = vld [vmem:[%s722] ss:$8 sm:$0xf]
      %s724 = scalar_lea.vmem [#allocation3], %s699
      %v725 = vld [vmem:[%s724] sm:$0x1]
      %v727 = vlaneseq
      %v728 = vshrl.u32 %v727, 7
      %v729 = vsub.s32 2, %v728
      %v730 = vrot.slane %v714, %v729
      %v732 = vadd.f32 %v725, %v730
      %v734 = vlaneseq
      %v735 = vshrl.u32 %v734, 7
      %v736 = vsub.s32 3, %v735
      %v737 = vrot.slane %v723, %v736
      %v739 = vadd.f32 %v732, %v737
      %s740 = scalar_lea.vmem [#allocation4], %s699
      %741 = vst [vmem:[%s740] sm:$0x1] %v739
      %v742 = vsub.f32 0.0, %v739
      %v743 = vmul.f32 %v742, 1.442695
      %v744 = vpow.pop %v743
      %v745 = vadd.f32 %v744, 1.0
      %v746 = vrcp.pop %v745
      %s747 = scalar_lea.vmem [#allocation5], %s705
      %v748 = vld [vmem:[%s747] sm:$0x1]
      %v749 = vlaneseq
      %v750 = vshrl.u32 %v749, 7
      %v751 = vsub.s32 1, %v750
      %v752 = vrot.slane %v714, %v751
      %v754 = vmul.f32 %v746, %v752
      %v755 = vadd.f32 %v748, %v754
      %756 = vst [vmem:[%s747] sm:$0x1] %v755
      %s757 = scalar_lea.vmem [#allocation6], %s705
      %v758 = vld [vmem:[%s757] sm:$0x1]
      %v759 = vadd.f32 %v758, %v746
      %760 = vst [vmem:[%s757] sm:$0x1] %v759
    $region94: #{gated_gcn_forward.1} parent=1 // loop_footer
      %s703 = sadd.s32 1, %s699
    $region95: #{gated_gcn_forward.1} parent=1 // loop_footer_branch
      %698 = sbr.rel target = $region91
    $region96: #{gated_gcn_forward.1} parent=1 // loop_exit
      _
    %v761 = vld [vmem:[#allocation2] sm:$0xff]
    %v762 = vld [vmem:[#allocation2 + $0x20] sm:$0xff]
    %v763 = vld [vmem:[#allocation5] sm:$0xff]
    %v764 = vld [vmem:[#allocation5 + $0x8] sm:$0xff]
    %v765 = vld [vmem:[#allocation6] sm:$0xff]
    %v766 = vld [vmem:[#allocation6 + $0x8] sm:$0xff]
    %v767 = vrcp.pop %v765
    %v768 = vrcp.pop %v766
    %v769 = vmul.f32 %v763, %v767
    %v770 = vmul.f32 %v764, %v768
    %v771 = vadd.f32 %v761, %v769
    %v772 = vadd.f32 %v762, %v770
    %774 = vset.pattern.permute.xlu0 0
    %775 = vperm.xlu0 %774, %v253
    %v776 = vpop.permute.xlu0 %775
    %779 = vset.pattern.permute.xlu0 0
    %780 = vperm.xlu0 %779, %v254
    %v781 = vpop.permute.xlu0 %780
    %v783 = vmul.f32 %v771, %v776
    %v784 = vmul.f32 %v772, %v781
    %v785 = vld [vmem:[#allocation4] sm:$0xff]
    %v786 = vld [vmem:[#allocation4 + $0x8] sm:$0xff]
    %v787 = vld [vmem:[#allocation4 + $0x10] sm:$0xff]
    %v788 = vld [vmem:[#allocation4 + $0x18] sm:$0xff]
    %790 = vset.pattern.permute.xlu0 0
    %791 = vperm.xlu0 %790, %v255
    %v792 = vpop.permute.xlu0 %791
    %795 = vset.pattern.permute.xlu0 0
    %796 = vperm.xlu0 %795, %v256
    %v797 = vpop.permute.xlu0 %796
    %800 = vset.pattern.permute.xlu0 0
    %801 = vperm.xlu0 %800, %v257
    %v802 = vpop.permute.xlu0 %801
    %805 = vset.pattern.permute.xlu0 0
    %806 = vperm.xlu0 %805, %v258
    %v807 = vpop.permute.xlu0 %806
    %v809 = vmul.f32 %v785, %v792
    %v810 = vmul.f32 %v786, %v797
    %v811 = vmul.f32 %v787, %v802
    %v812 = vmul.f32 %v788, %v807
    %v813 = vadd.f32 %v783, %v784
    %v814 = vrot.slane %v813, 4
    %v815 = vadd.f32 %v813, %v814
    %v816 = vrot.slane %v815, 2
    %v817 = vadd.f32 %v815, %v816
    %v818 = vrot.slane %v817, 1
    %v819 = vadd.f32 %v817, %v818
    %v820 = vrcp.pop 16.0
    %v821 = vmul.f32 %v819, %v820
    %v822 = vsub.f32 %v783, %v821
    %v823 = vsub.f32 %v784, %v821
    %v824 = vmul.f32 %v822, %v822
    %v825 = vmul.f32 %v823, %v823
    %v826 = vadd.f32 %v824, %v825
    %v827 = vrot.slane %v826, 4
    %v828 = vadd.f32 %v826, %v827
    %v829 = vrot.slane %v828, 2
    %v830 = vadd.f32 %v828, %v829
    %v831 = vrot.slane %v830, 1
    %v832 = vadd.f32 %v830, %v831
    %v833 = vmul.f32 %v832, %v820
    %v834 = vadd.f32 %v833, 1e-05
    %v835 = vrsqrt.pop %v834
    %v836 = vmul.f32 %v822, %v835
    %v837 = vmul.f32 %v823, %v835
    %v838 = vmax.f32 %v836, 0.0
    %v839 = vmax.f32 %v837, 0.0
    %v840 = vadd.f32 %v201, %v838
    %v841 = vadd.f32 %v204, %v839
    %v842 = vadd.f32 %v809, %v810
    %v843 = vadd.f32 %v842, %v811
    %v844 = vadd.f32 %v843, %v812
    %v845 = vrot.slane %v844, 4
    %v846 = vadd.f32 %v844, %v845
    %v847 = vrot.slane %v846, 2
    %v848 = vadd.f32 %v846, %v847
    %v849 = vrot.slane %v848, 1
    %v850 = vadd.f32 %v848, %v849
    %v851 = vrcp.pop 32.0
    %v852 = vmul.f32 %v850, %v851
    %v853 = vsub.f32 %v809, %v852
    %v854 = vsub.f32 %v810, %v852
    %v855 = vsub.f32 %v811, %v852
    %v856 = vsub.f32 %v812, %v852
    %v857 = vmul.f32 %v853, %v853
    %v858 = vmul.f32 %v854, %v854
    %v859 = vmul.f32 %v855, %v855
    %v860 = vmul.f32 %v856, %v856
    %v861 = vadd.f32 %v857, %v858
    %v862 = vadd.f32 %v861, %v859
    %v863 = vadd.f32 %v862, %v860
    %v864 = vrot.slane %v863, 4
    %v865 = vadd.f32 %v863, %v864
    %v866 = vrot.slane %v865, 2
    %v867 = vadd.f32 %v865, %v866
    %v868 = vrot.slane %v867, 1
    %v869 = vadd.f32 %v867, %v868
    %v870 = vmul.f32 %v869, %v851
    %v871 = vadd.f32 %v870, 1e-05
    %v872 = vrsqrt.pop %v871
    %v873 = vmul.f32 %v853, %v872
    %v874 = vmul.f32 %v854, %v872
    %v875 = vmul.f32 %v855, %v872
    %v876 = vmul.f32 %v856, %v872
    %v877 = vmax.f32 %v873, 0.0
    %v878 = vmax.f32 %v874, 0.0
    %v879 = vmax.f32 %v875, 0.0
    %v880 = vmax.f32 %v876, 0.0
    %v881 = vadd.f32 %v249, %v877
    %v882 = vadd.f32 %v250, %v878
    %v883 = vadd.f32 %v251, %v879
    %v884 = vadd.f32 %v252, %v880
    %s885 = scalar_lea.vmem %s10, 256
    %v886 = vld [vmem:[%s885] sm:$0xff]
    %v887 = vld [vmem:[%s885 + $0x8] sm:$0xff]
    %v888 = vld [vmem:[%s885 + $0x10] sm:$0xff]
    %v889 = vld [vmem:[%s885 + $0x18] sm:$0xff]
    %v890 = vld [vmem:[%s885 + $0x20] sm:$0xff]
    %v891 = vld [vmem:[%s885 + $0x28] sm:$0xff]
    %v892 = vld [vmem:[%s885 + $0x30] sm:$0xff]
    %v893 = vld [vmem:[%s885 + $0x38] sm:$0xff]
    %v894 = vld [vmem:[%s885 + $0x40] sm:$0xff]
    %v895 = vld [vmem:[%s885 + $0x48] sm:$0xff]
    %v896 = vld [vmem:[%s885 + $0x50] sm:$0xff]
    %v897 = vld [vmem:[%s885 + $0x58] sm:$0xff]
    %v898 = vld [vmem:[%s885 + $0x60] sm:$0xff]
    %v899 = vld [vmem:[%s885 + $0x68] sm:$0xff]
    %v900 = vld [vmem:[%s885 + $0x70] sm:$0xff]
    %v901 = vld [vmem:[%s885 + $0x78] sm:$0xff]
    %v902 = vld [vmem:[%s885 + $0x80] sm:$0xff]
    %v903 = vld [vmem:[%s885 + $0x88] sm:$0xff]
    %v904 = vld [vmem:[%s885 + $0x90] sm:$0xff]
    %v905 = vld [vmem:[%s885 + $0x98] sm:$0xff]
    %v906 = vld [vmem:[%s885 + $0xa0] sm:$0xff]
    %v907 = vld [vmem:[%s885 + $0xa8] sm:$0xff]
    %v908 = vld [vmem:[%s885 + $0xb0] sm:$0xff]
    %v909 = vld [vmem:[%s885 + $0xb8] sm:$0xff]
    %v910 = vld [vmem:[%s885 + $0xc0] sm:$0xff]
    %v911 = vld [vmem:[%s885 + $0xc8] sm:$0xff]
    %v912 = vld [vmem:[%s885 + $0xd0] sm:$0xff]
    %v913 = vld [vmem:[%s885 + $0xd8] sm:$0xff]
    %v914 = vld [vmem:[%s885 + $0xe0] sm:$0xff]
    %v915 = vld [vmem:[%s885 + $0xe8] sm:$0xff]
    %v916 = vld [vmem:[%s885 + $0xf0] sm:$0xff]
    %v917 = vld [vmem:[%s885 + $0xf8] sm:$0xff]
    %v918 = vpack.c.bf16 %v841, %v840
    %s919 = scalar_lea.vmem %s11, 4
    %v920 = vld [vmem:[%s919] sm:$0xf]
    %v922 = vlaneseq
    %v923 = vshrl.u32 %v922, 7
    %v924 = vsub.s32 0, %v923
    %v925 = vrot.slane %v920, %v924
    %v926 = vlaneseq
    %v927 = vshrl.u32 %v926, 7
    %v928 = vsub.s32 1, %v927
    %v929 = vrot.slane %v920, %v928
    %v930 = vlaneseq
    %v931 = vshrl.u32 %v930, 7
    %v932 = vsub.s32 2, %v931
    %v933 = vrot.slane %v920, %v932
    %v934 = vlaneseq
    %v935 = vshrl.u32 %v934, 7
    %v936 = vsub.s32 3, %v935
    %v937 = vrot.slane %v920, %v936
    %v974 = vunpack.c.l.b16 %v886
    %v975 = vunpack.c.h.b16 %v886
    %v976 = vunpack.c.l.b16 %v887
    %v977 = vunpack.c.h.b16 %v887
    %v978 = vunpack.c.l.b16 %v888
    %v979 = vunpack.c.h.b16 %v888
    %v980 = vunpack.c.l.b16 %v889
    %v981 = vunpack.c.h.b16 %v889
    %v982 = vunpack.c.l.b16 %v890
    %v983 = vunpack.c.h.b16 %v890
    %v984 = vunpack.c.l.b16 %v891
    %v985 = vunpack.c.h.b16 %v891
    %v986 = vunpack.c.l.b16 %v892
    %v987 = vunpack.c.h.b16 %v892
    %v988 = vunpack.c.l.b16 %v893
    %v989 = vunpack.c.h.b16 %v893
    %v990 = vunpack.c.l.b16 %v894
    %v991 = vunpack.c.h.b16 %v894
    %v992 = vunpack.c.l.b16 %v895
    %v993 = vunpack.c.h.b16 %v895
    %v994 = vunpack.c.l.b16 %v896
    %v995 = vunpack.c.h.b16 %v896
    %v996 = vunpack.c.l.b16 %v897
    %v997 = vunpack.c.h.b16 %v897
    %v998 = vunpack.c.l.b16 %v898
    %v999 = vunpack.c.h.b16 %v898
    %v1000 = vunpack.c.l.b16 %v899
    %v1001 = vunpack.c.h.b16 %v899
    %v1002 = vunpack.c.l.b16 %v900
    %v1003 = vunpack.c.h.b16 %v900
    %v1004 = vunpack.c.l.b16 %v901
    %v1005 = vunpack.c.h.b16 %v901
    %v1006 = vunpack.c.l.b16 %v902
    %v1007 = vunpack.c.h.b16 %v902
    %v1008 = vunpack.c.l.b16 %v903
    %v1009 = vunpack.c.h.b16 %v903
    %v1010 = vunpack.c.l.b16 %v904
    %v1011 = vunpack.c.h.b16 %v904
    %v1012 = vunpack.c.l.b16 %v905
    %v1013 = vunpack.c.h.b16 %v905
    %v1014 = vunpack.c.l.b16 %v906
    %v1015 = vunpack.c.h.b16 %v906
    %v1016 = vunpack.c.l.b16 %v907
    %v1017 = vunpack.c.h.b16 %v907
    %v1018 = vunpack.c.l.b16 %v908
    %v1019 = vunpack.c.h.b16 %v908
    %v1020 = vunpack.c.l.b16 %v909
    %v1021 = vunpack.c.h.b16 %v909
    %v1022 = vunpack.c.l.b16 %v910
    %v1023 = vunpack.c.h.b16 %v910
    %v1024 = vunpack.c.l.b16 %v911
    %v1025 = vunpack.c.h.b16 %v911
    %v1026 = vunpack.c.l.b16 %v912
    %v1027 = vunpack.c.h.b16 %v912
    %v1028 = vunpack.c.l.b16 %v913
    %v1029 = vunpack.c.h.b16 %v913
    %v1030 = vunpack.c.l.b16 %v914
    %v1031 = vunpack.c.h.b16 %v914
    %v1032 = vunpack.c.l.b16 %v915
    %v1033 = vunpack.c.h.b16 %v915
    %v1034 = vunpack.c.l.b16 %v916
    %v1035 = vunpack.c.h.b16 %v916
    %v1036 = vunpack.c.l.b16 %v917
    %v1037 = vunpack.c.h.b16 %v917
    %v1038 = vpack.c.b16 %v978, %v974
    %v1039 = vpack.c.b16 %v979, %v975
    %v1040 = vpack.c.b16 %v980, %v976
    %v1041 = vpack.c.b16 %v981, %v977
    %v1042 = vpack.c.b16 %v986, %v982
    %v1043 = vpack.c.b16 %v987, %v983
    %v1044 = vpack.c.b16 %v988, %v984
    %v1045 = vpack.c.b16 %v989, %v985
    %v1046 = vpack.c.b16 %v994, %v990
    %v1047 = vpack.c.b16 %v995, %v991
    %v1048 = vpack.c.b16 %v996, %v992
    %v1049 = vpack.c.b16 %v997, %v993
    %v1050 = vpack.c.b16 %v1002, %v998
    %v1051 = vpack.c.b16 %v1003, %v999
    %v1052 = vpack.c.b16 %v1004, %v1000
    %v1053 = vpack.c.b16 %v1005, %v1001
    %v1054 = vpack.c.b16 %v1010, %v1006
    %v1055 = vpack.c.b16 %v1011, %v1007
    %v1056 = vpack.c.b16 %v1012, %v1008
    %v1057 = vpack.c.b16 %v1013, %v1009
    %v1058 = vpack.c.b16 %v1018, %v1014
    %v1059 = vpack.c.b16 %v1019, %v1015
    %v1060 = vpack.c.b16 %v1020, %v1016
    %v1061 = vpack.c.b16 %v1021, %v1017
    %v1062 = vpack.c.b16 %v1026, %v1022
    %v1063 = vpack.c.b16 %v1027, %v1023
    %v1064 = vpack.c.b16 %v1028, %v1024
    %v1065 = vpack.c.b16 %v1029, %v1025
    %v1066 = vpack.c.b16 %v1034, %v1030
    %v1067 = vpack.c.b16 %v1035, %v1031
    %v1068 = vpack.c.b16 %v1036, %v1032
    %v1069 = vpack.c.b16 %v1037, %v1033
    %1102 = vmatprep.subr.bf16.mxu0 %v1039
    %1103 = vmatpush1.bf16.msra.mxu0 %v1038
    %1104 = vmatprep.subr.bf16.mxu0 %v1043
    %1105 = vmatpush1.bf16.msra.mxu0 %v1042
    %1106 = vmatprep.subr.bf16.mxu0 %v1047
    %1107 = vmatpush1.bf16.msra.mxu0 %v1046
    %1108 = vmatprep.subr.bf16.mxu0 %v1051
    %1109 = vmatpush1.bf16.msra.mxu0 %v1050
    %1110 = vmatprep.subr.bf16.mxu0 %v1055
    %1111 = vmatpush1.bf16.msra.mxu0 %v1054
    %1112 = vmatprep.subr.bf16.mxu0 %v1059
    %1113 = vmatpush1.bf16.msra.mxu0 %v1058
    %1114 = vmatprep.subr.bf16.mxu0 %v1063
    %1115 = vmatpush1.bf16.msra.mxu0 %v1062
    %1116 = vmatprep.subr.bf16.mxu0 %v1067
    %1117 = vmatpush1.bf16.msra.mxu0 %v1066
    %1118 = vmatprep.subr.bf16.mxu0 0
    %1119 = vmatpush1.bf16.msra.mxu0 0
    %1120 = vmatprep.subr.bf16.mxu0 0
    %1121 = vmatpush1.bf16.msra.mxu0 0
    %1122 = vmatprep.subr.bf16.mxu0 0
    %1123 = vmatpush1.bf16.msra.mxu0 0
    %1124 = vmatprep.subr.bf16.mxu0 0
    %1125 = vmatpush1.bf16.msra.mxu0 0
    %1126 = vmatprep.subr.bf16.mxu0 0
    %1127 = vmatpush1.bf16.msra.mxu0 0
    %1128 = vmatprep.subr.bf16.mxu0 0
    %1129 = vmatpush1.bf16.msra.mxu0 0
    %1130 = vmatprep.subr.bf16.mxu0 0
    %1131 = vmatpush1.bf16.msra.mxu0 0
    %1132 = vmatprep.subr.bf16.mxu0 0
    %1133 = vmatpush1.bf16.msra.mxu0 0
    %1134 = vmatprep.mubr.bf16.mxu0 0
    %1135 = vmatmul.mubr.bf16.gmra.mrb[0].mxu0 %v918
    %v1136 = vpop.f32.mrb[0].mxu0
    %v1137 = vadd.f32 %v925, %v1136
    %v1138 = vpop.f32.mrb[0].mxu0
    %v1139 = vadd.f32 %v929, %v1138
    %v1140 = vpop.f32.mrb[0].mxu0
    %v1141 = vadd.f32 %v925, %v1140
    %v1142 = vpop.f32.mrb[0].mxu0
    %v1143 = vadd.f32 %v929, %v1142
    %1144 = vdwg.mxu0
    %1145 = vmatprep.subr.bf16.mxu0 %v1041
    %1146 = vmatpush1.bf16.msra.mxu0 %v1040
    %1147 = vmatprep.subr.bf16.mxu0 %v1045
    %1148 = vmatpush1.bf16.msra.mxu0 %v1044
    %1149 = vmatprep.subr.bf16.mxu0 %v1049
    %1150 = vmatpush1.bf16.msra.mxu0 %v1048
    %1151 = vmatprep.subr.bf16.mxu0 %v1053
    %1152 = vmatpush1.bf16.msra.mxu0 %v1052
    %1153 = vmatprep.subr.bf16.mxu0 %v1057
    %1154 = vmatpush1.bf16.msra.mxu0 %v1056
    %1155 = vmatprep.subr.bf16.mxu0 %v1061
    %1156 = vmatpush1.bf16.msra.mxu0 %v1060
    %1157 = vmatprep.subr.bf16.mxu0 %v1065
    %1158 = vmatpush1.bf16.msra.mxu0 %v1064
    %1159 = vmatprep.subr.bf16.mxu0 %v1069
    %1160 = vmatpush1.bf16.msra.mxu0 %v1068
    %1161 = vmatprep.subr.bf16.mxu0 0
    %1162 = vmatpush1.bf16.msra.mxu0 0
    %1163 = vmatprep.subr.bf16.mxu0 0
    %1164 = vmatpush1.bf16.msra.mxu0 0
    %1165 = vmatprep.subr.bf16.mxu0 0
    %1166 = vmatpush1.bf16.msra.mxu0 0
    %1167 = vmatprep.subr.bf16.mxu0 0
    %1168 = vmatpush1.bf16.msra.mxu0 0
    %1169 = vmatprep.subr.bf16.mxu0 0
    %1170 = vmatpush1.bf16.msra.mxu0 0
    %1171 = vmatprep.subr.bf16.mxu0 0
    %1172 = vmatpush1.bf16.msra.mxu0 0
    %1173 = vmatprep.subr.bf16.mxu0 0
    %1174 = vmatpush1.bf16.msra.mxu0 0
    %1175 = vmatprep.subr.bf16.mxu0 0
    %1176 = vmatpush1.bf16.msra.mxu0 0
    %1177 = vmatprep.mubr.bf16.mxu0 0
    %1178 = vmatmul.mubr.bf16.gmra.mrb[0].mxu0 %v918
    %v1179 = vpop.f32.mrb[0].mxu0
    %v1180 = vadd.f32 %v933, %v1179
    %v1181 = vpop.f32.mrb[0].mxu0
    %v1182 = vadd.f32 %v937, %v1181
    %v1183 = vpop.f32.mrb[0].mxu0
    %v1184 = vadd.f32 %v933, %v1183
    %v1185 = vpop.f32.mrb[0].mxu0
    %v1186 = vadd.f32 %v937, %v1185
    %1187 = vdwg.mxu0
    %1188 = vst [vmem:[#allocation2] sm:$0xff] %v1137
    %1189 = vst [vmem:[#allocation2 + $0x8] sm:$0xff] %v1139
    %1190 = vst [vmem:[#allocation2 + $0x10] sm:$0xff] %v1180
    %1191 = vst [vmem:[#allocation2 + $0x18] sm:$0xff] %v1182
    %1192 = vst [vmem:[#allocation2 + $0x20] sm:$0xff] %v1141
    %1193 = vst [vmem:[#allocation2 + $0x28] sm:$0xff] %v1143
    %1194 = vst [vmem:[#allocation2 + $0x30] sm:$0xff] %v1184
    %1195 = vst [vmem:[#allocation2 + $0x38] sm:$0xff] %v1186
    %s1196 = scalar_lea.vmem %s12, 64
    %v1197 = vld [vmem:[%s1196] sm:$0xf]
    %v1198 = vld [vmem:[%s1196 + $0x4] sm:$0xf]
    %v1199 = vld [vmem:[%s1196 + $0x8] sm:$0xf]
    %v1200 = vld [vmem:[%s1196 + $0xc] sm:$0xf]
    %v1201 = vld [vmem:[%s1196 + $0x10] sm:$0xf]
    %v1202 = vld [vmem:[%s1196 + $0x14] sm:$0xf]
    %v1203 = vld [vmem:[%s1196 + $0x18] sm:$0xf]
    %v1204 = vld [vmem:[%s1196 + $0x1c] sm:$0xf]
    %v1205 = vld [vmem:[%s1196 + $0x20] sm:$0xf]
    %v1206 = vld [vmem:[%s1196 + $0x24] sm:$0xf]
    %v1207 = vld [vmem:[%s1196 + $0x28] sm:$0xf]
    %v1208 = vld [vmem:[%s1196 + $0x2c] sm:$0xf]
    %v1209 = vld [vmem:[%s1196 + $0x30] sm:$0xf]
    %v1210 = vld [vmem:[%s1196 + $0x34] sm:$0xf]
    %v1211 = vld [vmem:[%s1196 + $0x38] sm:$0xf]
    %v1212 = vld [vmem:[%s1196 + $0x3c] sm:$0xf]
    %v1213 = vpack.c.bf16 %v882, %v881
    %v1214 = vpack.c.bf16 %v884, %v883
    %s1215 = scalar_lea.vmem %s13, 1
    %v1216 = vld [vmem:[%s1215] sm:$0x1]
    %v1218 = vlaneseq
    %v1219 = vshrl.u32 %v1218, 7
    %v1220 = vsub.s32 0, %v1219
    %v1221 = vrot.slane %v1216, %v1220
    %v1239 = vunpack.c.l.b16 %v1197
    %v1240 = vunpack.c.l.b16 %v1198
    %v1241 = vunpack.c.l.b16 %v1199
    %v1242 = vunpack.c.l.b16 %v1200
    %v1243 = vunpack.c.l.b16 %v1201
    %v1244 = vunpack.c.l.b16 %v1202
    %v1245 = vunpack.c.l.b16 %v1203
    %v1246 = vunpack.c.l.b16 %v1204
    %v1247 = vunpack.c.l.b16 %v1205
    %v1248 = vunpack.c.l.b16 %v1206
    %v1249 = vunpack.c.l.b16 %v1207
    %v1250 = vunpack.c.l.b16 %v1208
    %v1251 = vunpack.c.l.b16 %v1209
    %v1252 = vunpack.c.l.b16 %v1210
    %v1253 = vunpack.c.l.b16 %v1211
    %v1254 = vunpack.c.l.b16 %v1212
    %v1255 = vpack.c.b16 %v1240, %v1239
    %v1256 = vpack.c.b16 %v1242, %v1241
    %v1257 = vpack.c.b16 %v1244, %v1243
    %v1258 = vpack.c.b16 %v1246, %v1245
    %v1259 = vpack.c.b16 %v1248, %v1247
    %v1260 = vpack.c.b16 %v1250, %v1249
    %v1261 = vpack.c.b16 %v1252, %v1251
    %v1262 = vpack.c.b16 %v1254, %v1253
    %1271 = vmatprep.subr.bf16.mxu0 0
    %1272 = vmatpush1.bf16.msra.mxu0 %v1255
    %1273 = vmatprep.subr.bf16.mxu0 0
    %1274 = vmatpush1.bf16.msra.mxu0 %v1256
    %1275 = vmatprep.subr.bf16.mxu0 0
    %1276 = vmatpush1.bf16.msra.mxu0 %v1257
    %1277 = vmatprep.subr.bf16.mxu0 0
    %1278 = vmatpush1.bf16.msra.mxu0 %v1258
    %1279 = vmatprep.subr.bf16.mxu0 0
    %1280 = vmatpush1.bf16.msra.mxu0 %v1259
    %1281 = vmatprep.subr.bf16.mxu0 0
    %1282 = vmatpush1.bf16.msra.mxu0 %v1260
    %1283 = vmatprep.subr.bf16.mxu0 0
    %1284 = vmatpush1.bf16.msra.mxu0 %v1261
    %1285 = vmatprep.subr.bf16.mxu0 0
    %1286 = vmatpush1.bf16.msra.mxu0 %v1262
    %1287 = vmatprep.subr.bf16.mxu0 0
    %1288 = vmatpush1.bf16.msra.mxu0 0
    %1289 = vmatprep.subr.bf16.mxu0 0
    %1290 = vmatpush1.bf16.msra.mxu0 0
    %1291 = vmatprep.subr.bf16.mxu0 0
    %1292 = vmatpush1.bf16.msra.mxu0 0
    %1293 = vmatprep.subr.bf16.mxu0 0
    %1294 = vmatpush1.bf16.msra.mxu0 0
    %1295 = vmatprep.subr.bf16.mxu0 0
    %1296 = vmatpush1.bf16.msra.mxu0 0
    %1297 = vmatprep.subr.bf16.mxu0 0
    %1298 = vmatpush1.bf16.msra.mxu0 0
    %1299 = vmatprep.subr.bf16.mxu0 0
    %1300 = vmatpush1.bf16.msra.mxu0 0
    %1301 = vmatprep.subr.bf16.mxu0 0
    %1302 = vmatpush1.bf16.msra.mxu0 0
    %1303 = vmatprep.mubr.bf16.mxu0 0
    %1304 = vmatmul.mubr.bf16.gmra.mrb[0].mxu0 %v1213
    %v1305 = vpop.f32.mrb[0].mxu0
    %v1306 = vadd.f32 %v1221, %v1305
    %v1307 = vpop.f32.mrb[0].mxu0
    %v1308 = vpop.f32.mrb[0].mxu0
    %v1309 = vadd.f32 %v1221, %v1308
    %v1310 = vpop.f32.mrb[0].mxu0
    %1311 = vmatprep.mubr.bf16.mxu0 0
    %1312 = vmatmul.mubr.bf16.gmra.mrb[0].mxu0 %v1214
    %v1313 = vpop.f32.mrb[0].mxu0
    %v1314 = vadd.f32 %v1221, %v1313
    %v1315 = vpop.f32.mrb[0].mxu0
    %v1316 = vpop.f32.mrb[0].mxu0
    %v1317 = vadd.f32 %v1221, %v1316
    %v1318 = vpop.f32.mrb[0].mxu0
    %1319 = vdwg.mxu0
    %1320 = vst [vmem:[#allocation3] sm:$0xff] %v1306
    %1321 = vst [vmem:[#allocation3 + $0x8] sm:$0xff] %v1309
    %1322 = vst [vmem:[#allocation3 + $0x10] sm:$0xff] %v1314
    %1323 = vst [vmem:[#allocation3 + $0x18] sm:$0xff] %v1317
    %1324 = vst [vmem:[#allocation5] sm:$0xff] 0.0
    %1325 = vst [vmem:[#allocation5 + $0x8] sm:$0xff] 0.0
    %1326 = vst [vmem:[#allocation6] sm:$0xff] 0.0
    %1327 = vst [vmem:[#allocation6 + $0x8] sm:$0xff] 0.0
    loop: start=0, step=1, limit=32
    $region97: #{gated_gcn_forward.1} parent=1 // loop_pre_header
      _
    $region98: #{gated_gcn_forward.1} parent=1 // loop_header
      %s1329 = sphi 0, %s1333
      %p1330 = scmp.ge.s32.totalorder %s1329, 32
    $region99: #{gated_gcn_forward.1} parent=1 // loop_header_branch
      %1332 = sbr.rel (%p1330) target = $region103
    $region100: #{gated_gcn_forward.1} parent=1 // loop_body
      %s1334 = sld [smem:[#allocation7 + %s1329]]
      %s1335 = sld [smem:[#allocation10 + %s1329]]
      %s1336 = sshra.s32 %s1334, 3
      %s1337 = sand.u32 %s1334, 7
      %s1338 = sshra.s32 %s1334, 3
      %s1339 = sand.u32 %s1334, 7
      %s1340 = smul.u32 %s1336, 4
      %s1341 = smul.u32 %s1340, 8
      %s1342 = sadd.s32 %s1341, %s1339
      %s1343 = scalar_lea.vmem [#allocation2], %s1342
      %v1344 = vld [vmem:[%s1343] ss:$8 sm:$0xf]
      %s1345 = sshra.s32 %s1335, 3
      %s1346 = sand.u32 %s1335, 7
      %s1347 = sshra.s32 %s1335, 3
      %s1348 = sand.u32 %s1335, 7
      %s1349 = smul.u32 %s1345, 4
      %s1350 = smul.u32 %s1349, 8
      %s1351 = sadd.s32 %s1350, %s1348
      %s1352 = scalar_lea.vmem [#allocation2], %s1351
      %v1353 = vld [vmem:[%s1352] ss:$8 sm:$0xf]
      %s1354 = scalar_lea.vmem [#allocation3], %s1329
      %v1355 = vld [vmem:[%s1354] sm:$0x1]
      %v1357 = vlaneseq
      %v1358 = vshrl.u32 %v1357, 7
      %v1359 = vsub.s32 2, %v1358
      %v1360 = vrot.slane %v1344, %v1359
      %v1362 = vadd.f32 %v1355, %v1360
      %v1364 = vlaneseq
      %v1365 = vshrl.u32 %v1364, 7
      %v1366 = vsub.s32 3, %v1365
      %v1367 = vrot.slane %v1353, %v1366
      %v1369 = vadd.f32 %v1362, %v1367
      %s1370 = scalar_lea.vmem [#allocation4], %s1329
      %1371 = vst [vmem:[%s1370] sm:$0x1] %v1369
      %v1372 = vsub.f32 0.0, %v1369
      %v1373 = vmul.f32 %v1372, 1.442695
      %v1374 = vpow.pop %v1373
      %v1375 = vadd.f32 %v1374, 1.0
      %v1376 = vrcp.pop %v1375
      %s1377 = scalar_lea.vmem [#allocation5], %s1335
      %v1378 = vld [vmem:[%s1377] sm:$0x1]
      %v1379 = vlaneseq
      %v1380 = vshrl.u32 %v1379, 7
      %v1381 = vsub.s32 1, %v1380
      %v1382 = vrot.slane %v1344, %v1381
      %v1384 = vmul.f32 %v1376, %v1382
      %v1385 = vadd.f32 %v1378, %v1384
      %1386 = vst [vmem:[%s1377] sm:$0x1] %v1385
      %s1387 = scalar_lea.vmem [#allocation6], %s1335
      %v1388 = vld [vmem:[%s1387] sm:$0x1]
      %v1389 = vadd.f32 %v1388, %v1376
      %1390 = vst [vmem:[%s1387] sm:$0x1] %v1389
    $region101: #{gated_gcn_forward.1} parent=1 // loop_footer
      %s1333 = sadd.s32 1, %s1329
    $region102: #{gated_gcn_forward.1} parent=1 // loop_footer_branch
      %1328 = sbr.rel target = $region98
    $region103: #{gated_gcn_forward.1} parent=1 // loop_exit
      _
    %v1391 = vld [vmem:[#allocation2] sm:$0xff]
    %v1392 = vld [vmem:[#allocation2 + $0x20] sm:$0xff]
    %v1393 = vld [vmem:[#allocation5] sm:$0xff]
    %v1394 = vld [vmem:[#allocation5 + $0x8] sm:$0xff]
    %v1395 = vld [vmem:[#allocation6] sm:$0xff]
    %v1396 = vld [vmem:[#allocation6 + $0x8] sm:$0xff]
    %v1397 = vrcp.pop %v1395
    %v1398 = vrcp.pop %v1396
    %v1399 = vmul.f32 %v1393, %v1397
    %v1400 = vmul.f32 %v1394, %v1398
    %v1401 = vadd.f32 %v1391, %v1399
    %v1402 = vadd.f32 %v1392, %v1400
    %v1403 = vmul.f32 %v1401, %v776
    %v1404 = vmul.f32 %v1402, %v781
    %v1405 = vadd.f32 %v1403, %v1404
    %v1406 = vrot.slane %v1405, 4
    %v1407 = vadd.f32 %v1405, %v1406
    %v1408 = vrot.slane %v1407, 2
    %v1409 = vadd.f32 %v1407, %v1408
    %v1410 = vrot.slane %v1409, 1
    %v1411 = vadd.f32 %v1409, %v1410
    %v1412 = vmul.f32 %v1411, %v820
    %v1413 = vsub.f32 %v1403, %v1412
    %v1414 = vsub.f32 %v1404, %v1412
    %v1415 = vmul.f32 %v1413, %v1413
    %v1416 = vmul.f32 %v1414, %v1414
    %v1417 = vadd.f32 %v1415, %v1416
    %v1418 = vrot.slane %v1417, 4
    %v1419 = vadd.f32 %v1417, %v1418
    %v1420 = vrot.slane %v1419, 2
    %v1421 = vadd.f32 %v1419, %v1420
    %v1422 = vrot.slane %v1421, 1
    %v1423 = vadd.f32 %v1421, %v1422
    %v1424 = vmul.f32 %v1423, %v820
    %v1425 = vadd.f32 %v1424, 1e-05
    %v1426 = vrsqrt.pop %v1425
    %v1427 = vmul.f32 %v1413, %v1426
    %v1428 = vmul.f32 %v1414, %v1426
    %v1429 = vmax.f32 %v1427, 0.0
    %v1430 = vmax.f32 %v1428, 0.0
    %v1431 = vadd.f32 %v840, %v1429
    %v1432 = vadd.f32 %v841, %v1430
    %v1433 = vadd.f32 %v1431, %v1432
    %v1434 = vrot.slane %v1433, 4
    %v1435 = vadd.f32 %v1433, %v1434
    %v1436 = vrot.slane %v1435, 2
    %v1437 = vadd.f32 %v1435, %v1436
    %v1438 = vrot.slane %v1437, 1
    %v1439 = vadd.f32 %v1437, %v1438
    %v1440 = vmul.f32 %v1439, %v820
    %v1441 = vld [vmem:[%s14] sm:$0xf]
    %v1442 = vld [vmem:[%s14 + $0x4] sm:$0xf]
    %v1443 = vld [vmem:[%s14 + $0x8] sm:$0xf]
    %v1444 = vld [vmem:[%s14 + $0xc] sm:$0xf]
    %v1445 = vld [vmem:[%s14 + $0x10] sm:$0xf]
    %v1446 = vld [vmem:[%s14 + $0x14] sm:$0xf]
    %v1447 = vld [vmem:[%s14 + $0x18] sm:$0xf]
    %v1448 = vld [vmem:[%s14 + $0x1c] sm:$0xf]
    %v1449 = vld [vmem:[%s14 + $0x20] sm:$0xf]
    %v1450 = vld [vmem:[%s14 + $0x24] sm:$0xf]
    %v1451 = vld [vmem:[%s14 + $0x28] sm:$0xf]
    %v1452 = vld [vmem:[%s14 + $0x2c] sm:$0xf]
    %v1453 = vld [vmem:[%s14 + $0x30] sm:$0xf]
    %v1454 = vld [vmem:[%s14 + $0x34] sm:$0xf]
    %v1455 = vld [vmem:[%s14 + $0x38] sm:$0xf]
    %v1456 = vld [vmem:[%s14 + $0x3c] sm:$0xf]
    %v1457 = vpack.c.bf16 %v1440, %v1440
    %v1458 = vld [vmem:[%s15] sm:$0x1]
    %v1475 = vunpack.c.l.b16 %v1441
    %v1476 = vunpack.c.l.b16 %v1442
    %v1477 = vunpack.c.l.b16 %v1443
    %v1478 = vunpack.c.l.b16 %v1444
    %v1479 = vunpack.c.l.b16 %v1445
    %v1480 = vunpack.c.l.b16 %v1446
    %v1481 = vunpack.c.l.b16 %v1447
    %v1482 = vunpack.c.l.b16 %v1448
    %v1483 = vunpack.c.l.b16 %v1449
    %v1484 = vunpack.c.l.b16 %v1450
    %v1485 = vunpack.c.l.b16 %v1451
    %v1486 = vunpack.c.l.b16 %v1452
    %v1487 = vunpack.c.l.b16 %v1453
    %v1488 = vunpack.c.l.b16 %v1454
    %v1489 = vunpack.c.l.b16 %v1455
    %v1490 = vunpack.c.l.b16 %v1456
    %v1491 = vpack.c.b16 %v1476, %v1475
    %v1492 = vpack.c.b16 %v1478, %v1477
    %v1493 = vpack.c.b16 %v1480, %v1479
    %v1494 = vpack.c.b16 %v1482, %v1481
    %v1495 = vpack.c.b16 %v1484, %v1483
    %v1496 = vpack.c.b16 %v1486, %v1485
    %v1497 = vpack.c.b16 %v1488, %v1487
    %v1498 = vpack.c.b16 %v1490, %v1489
    %1507 = vmatprep.subr.bf16.mxu0 0
    %1508 = vmatpush1.bf16.msra.mxu0 %v1491
    %1509 = vmatprep.subr.bf16.mxu0 0
    %1510 = vmatpush1.bf16.msra.mxu0 %v1492
    %1511 = vmatprep.subr.bf16.mxu0 0
    %1512 = vmatpush1.bf16.msra.mxu0 %v1493
    %1513 = vmatprep.subr.bf16.mxu0 0
    %1514 = vmatpush1.bf16.msra.mxu0 %v1494
    %1515 = vmatprep.subr.bf16.mxu0 0
    %1516 = vmatpush1.bf16.msra.mxu0 %v1495
    %1517 = vmatprep.subr.bf16.mxu0 0
    %1518 = vmatpush1.bf16.msra.mxu0 %v1496
    %1519 = vmatprep.subr.bf16.mxu0 0
    %1520 = vmatpush1.bf16.msra.mxu0 %v1497
    %1521 = vmatprep.subr.bf16.mxu0 0
    %1522 = vmatpush1.bf16.msra.mxu0 %v1498
    %1523 = vmatprep.subr.bf16.mxu0 0
    %1524 = vmatpush1.bf16.msra.mxu0 0
    %1525 = vmatprep.subr.bf16.mxu0 0
    %1526 = vmatpush1.bf16.msra.mxu0 0
    %1527 = vmatprep.subr.bf16.mxu0 0
    %1528 = vmatpush1.bf16.msra.mxu0 0
    %1529 = vmatprep.subr.bf16.mxu0 0
    %1530 = vmatpush1.bf16.msra.mxu0 0
    %1531 = vmatprep.subr.bf16.mxu0 0
    %1532 = vmatpush1.bf16.msra.mxu0 0
    %1533 = vmatprep.subr.bf16.mxu0 0
    %1534 = vmatpush1.bf16.msra.mxu0 0
    %1535 = vmatprep.subr.bf16.mxu0 0
    %1536 = vmatpush1.bf16.msra.mxu0 0
    %1537 = vmatprep.subr.bf16.mxu0 0
    %1538 = vmatpush1.bf16.msra.mxu0 0
    %1539 = vmatprep.mubr.bf16.mxu0 0
    %1540 = vmatmul.mubr.bf16.gmra.mrb[0].mxu0 %v1457
    %v1541 = vpop.f32.mrb[0].mxu0
    %v1542 = vadd.f32 %v1458, %v1541
    %v1543 = vpop.f32.mrb[0].mxu0
    %v1544 = vpop.f32.mrb[0].mxu0
    %v1545 = vpop.f32.mrb[0].mxu0
    %1546 = vdwg.mxu0
    %v1547 = vmax.f32 %v1542, 0.0
    %v1548 = vld [vmem:[%s16] sm:$0xf]
    %v1549 = vld [vmem:[%s16 + $0x4] sm:$0xf]
    %v1550 = vld [vmem:[%s16 + $0x8] sm:$0xf]
    %v1551 = vld [vmem:[%s16 + $0xc] sm:$0xf]
    %v1552 = vld [vmem:[%s16 + $0x10] sm:$0xf]
    %v1553 = vld [vmem:[%s16 + $0x14] sm:$0xf]
    %v1554 = vld [vmem:[%s16 + $0x18] sm:$0xf]
    %v1555 = vld [vmem:[%s16 + $0x1c] sm:$0xf]
    %v1556 = vld [vmem:[%s16 + $0x20] sm:$0xf]
    %v1557 = vld [vmem:[%s16 + $0x24] sm:$0xf]
    %v1558 = vld [vmem:[%s16 + $0x28] sm:$0xf]
    %v1559 = vld [vmem:[%s16 + $0x2c] sm:$0xf]
    %v1560 = vld [vmem:[%s16 + $0x30] sm:$0xf]
    %v1561 = vld [vmem:[%s16 + $0x34] sm:$0xf]
    %v1562 = vld [vmem:[%s16 + $0x38] sm:$0xf]
    %v1563 = vld [vmem:[%s16 + $0x3c] sm:$0xf]
    %v1564 = vpack.c.bf16 %v1547, %v1547
    %v1565 = vld [vmem:[%s17] sm:$0x1]
    %v1582 = vunpack.c.l.b16 %v1548
    %v1583 = vunpack.c.l.b16 %v1549
    %v1584 = vunpack.c.l.b16 %v1550
    %v1585 = vunpack.c.l.b16 %v1551
    %v1586 = vunpack.c.l.b16 %v1552
    %v1587 = vunpack.c.l.b16 %v1553
    %v1588 = vunpack.c.l.b16 %v1554
    %v1589 = vunpack.c.l.b16 %v1555
    %v1590 = vunpack.c.l.b16 %v1556
    %v1591 = vunpack.c.l.b16 %v1557
    %v1592 = vunpack.c.l.b16 %v1558
    %v1593 = vunpack.c.l.b16 %v1559
    %v1594 = vunpack.c.l.b16 %v1560
    %v1595 = vunpack.c.l.b16 %v1561
    %v1596 = vunpack.c.l.b16 %v1562
    %v1597 = vunpack.c.l.b16 %v1563
    %v1598 = vpack.c.b16 %v1583, %v1582
    %v1599 = vpack.c.b16 %v1585, %v1584
    %v1600 = vpack.c.b16 %v1587, %v1586
    %v1601 = vpack.c.b16 %v1589, %v1588
    %v1602 = vpack.c.b16 %v1591, %v1590
    %v1603 = vpack.c.b16 %v1593, %v1592
    %v1604 = vpack.c.b16 %v1595, %v1594
    %v1605 = vpack.c.b16 %v1597, %v1596
    %1614 = vmatprep.subr.bf16.mxu0 0
    %1615 = vmatpush1.bf16.msra.mxu0 %v1598
    %1616 = vmatprep.subr.bf16.mxu0 0
    %1617 = vmatpush1.bf16.msra.mxu0 %v1599
    %1618 = vmatprep.subr.bf16.mxu0 0
    %1619 = vmatpush1.bf16.msra.mxu0 %v1600
    %1620 = vmatprep.subr.bf16.mxu0 0
    %1621 = vmatpush1.bf16.msra.mxu0 %v1601
    %1622 = vmatprep.subr.bf16.mxu0 0
    %1623 = vmatpush1.bf16.msra.mxu0 %v1602
    %1624 = vmatprep.subr.bf16.mxu0 0
    %1625 = vmatpush1.bf16.msra.mxu0 %v1603
    %1626 = vmatprep.subr.bf16.mxu0 0
    %1627 = vmatpush1.bf16.msra.mxu0 %v1604
    %1628 = vmatprep.subr.bf16.mxu0 0
    %1629 = vmatpush1.bf16.msra.mxu0 %v1605
    %1630 = vmatprep.subr.bf16.mxu0 0
    %1631 = vmatpush1.bf16.msra.mxu0 0
    %1632 = vmatprep.subr.bf16.mxu0 0
    %1633 = vmatpush1.bf16.msra.mxu0 0
    %1634 = vmatprep.subr.bf16.mxu0 0
    %1635 = vmatpush1.bf16.msra.mxu0 0
    %1636 = vmatprep.subr.bf16.mxu0 0
    %1637 = vmatpush1.bf16.msra.mxu0 0
    %1638 = vmatprep.subr.bf16.mxu0 0
    %1639 = vmatpush1.bf16.msra.mxu0 0
    %1640 = vmatprep.subr.bf16.mxu0 0
    %1641 = vmatpush1.bf16.msra.mxu0 0
    %1642 = vmatprep.subr.bf16.mxu0 0
    %1643 = vmatpush1.bf16.msra.mxu0 0
    %1644 = vmatprep.subr.bf16.mxu0 0
    %1645 = vmatpush1.bf16.msra.mxu0 0
    %1646 = vmatprep.mubr.bf16.mxu0 0
    %1647 = vmatmul.mubr.bf16.gmra.mrb[0].mxu0 %v1564
    %v1648 = vpop.f32.mrb[0].mxu0
    %v1649 = vadd.f32 %v1565, %v1648
    %v1650 = vpop.f32.mrb[0].mxu0
    %v1651 = vpop.f32.mrb[0].mxu0
    %v1652 = vpop.f32.mrb[0].mxu0
    %1653 = vdwg.mxu0
    %v1654 = vmax.f32 %v1649, 0.0
    %v1655 = vld [vmem:[%s18] sm:$0xf]
    %v1656 = vld [vmem:[%s18 + $0x4] sm:$0xf]
    %v1657 = vld [vmem:[%s18 + $0x8] sm:$0xf]
    %v1658 = vld [vmem:[%s18 + $0xc] sm:$0xf]
    %v1659 = vld [vmem:[%s18 + $0x10] sm:$0xf]
    %v1660 = vld [vmem:[%s18 + $0x14] sm:$0xf]
    %v1661 = vld [vmem:[%s18 + $0x18] sm:$0xf]
    %v1662 = vld [vmem:[%s18 + $0x1c] sm:$0xf]
    %v1663 = vld [vmem:[%s18 + $0x20] sm:$0xf]
    %v1664 = vld [vmem:[%s18 + $0x24] sm:$0xf]
    %v1665 = vld [vmem:[%s18 + $0x28] sm:$0xf]
    %v1666 = vld [vmem:[%s18 + $0x2c] sm:$0xf]
    %v1667 = vld [vmem:[%s18 + $0x30] sm:$0xf]
    %v1668 = vld [vmem:[%s18 + $0x34] sm:$0xf]
    %v1669 = vld [vmem:[%s18 + $0x38] sm:$0xf]
    %v1670 = vld [vmem:[%s18 + $0x3c] sm:$0xf]
    %v1671 = vpack.c.bf16 %v1654, %v1654
    %v1672 = vld [vmem:[%s19] sm:$0x1]
    %v1689 = vunpack.c.l.b16 %v1655
    %v1690 = vunpack.c.l.b16 %v1656
    %v1691 = vunpack.c.l.b16 %v1657
    %v1692 = vunpack.c.l.b16 %v1658
    %v1693 = vunpack.c.l.b16 %v1659
    %v1694 = vunpack.c.l.b16 %v1660
    %v1695 = vunpack.c.l.b16 %v1661
    %v1696 = vunpack.c.l.b16 %v1662
    %v1697 = vunpack.c.l.b16 %v1663
    %v1698 = vunpack.c.l.b16 %v1664
    %v1699 = vunpack.c.l.b16 %v1665
    %v1700 = vunpack.c.l.b16 %v1666
    %v1701 = vunpack.c.l.b16 %v1667
    %v1702 = vunpack.c.l.b16 %v1668
    %v1703 = vunpack.c.l.b16 %v1669
    %v1704 = vunpack.c.l.b16 %v1670
    %v1705 = vpack.c.b16 %v1690, %v1689
    %v1706 = vpack.c.b16 %v1692, %v1691
    %v1707 = vpack.c.b16 %v1694, %v1693
    %v1708 = vpack.c.b16 %v1696, %v1695
    %v1709 = vpack.c.b16 %v1698, %v1697
    %v1710 = vpack.c.b16 %v1700, %v1699
    %v1711 = vpack.c.b16 %v1702, %v1701
    %v1712 = vpack.c.b16 %v1704, %v1703
    %1721 = vmatprep.subr.bf16.mxu0 0
    %1722 = vmatpush1.bf16.msra.mxu0 %v1705
    %1723 = vmatprep.subr.bf16.mxu0 0
    %1724 = vmatpush1.bf16.msra.mxu0 %v1706
    %1725 = vmatprep.subr.bf16.mxu0 0
    %1726 = vmatpush1.bf16.msra.mxu0 %v1707
    %1727 = vmatprep.subr.bf16.mxu0 0
    %1728 = vmatpush1.bf16.msra.mxu0 %v1708
    %1729 = vmatprep.subr.bf16.mxu0 0
    %1730 = vmatpush1.bf16.msra.mxu0 %v1709
    %1731 = vmatprep.subr.bf16.mxu0 0
    %1732 = vmatpush1.bf16.msra.mxu0 %v1710
    %1733 = vmatprep.subr.bf16.mxu0 0
    %1734 = vmatpush1.bf16.msra.mxu0 %v1711
    %1735 = vmatprep.subr.bf16.mxu0 0
    %1736 = vmatpush1.bf16.msra.mxu0 %v1712
    %1737 = vmatprep.subr.bf16.mxu0 0
    %1738 = vmatpush1.bf16.msra.mxu0 0
    %1739 = vmatprep.subr.bf16.mxu0 0
    %1740 = vmatpush1.bf16.msra.mxu0 0
    %1741 = vmatprep.subr.bf16.mxu0 0
    %1742 = vmatpush1.bf16.msra.mxu0 0
    %1743 = vmatprep.subr.bf16.mxu0 0
    %1744 = vmatpush1.bf16.msra.mxu0 0
    %1745 = vmatprep.subr.bf16.mxu0 0
    %1746 = vmatpush1.bf16.msra.mxu0 0
    %1747 = vmatprep.subr.bf16.mxu0 0
    %1748 = vmatpush1.bf16.msra.mxu0 0
    %1749 = vmatprep.subr.bf16.mxu0 0
    %1750 = vmatpush1.bf16.msra.mxu0 0
    %1751 = vmatprep.subr.bf16.mxu0 0
    %1752 = vmatpush1.bf16.msra.mxu0 0
    %1753 = vmatprep.mubr.bf16.mxu0 0
    %1754 = vmatmul.mubr.bf16.gmra.mrb[0].mxu0 %v1671
    %v1755 = vpop.f32.mrb[0].mxu0
    %v1756 = vadd.f32 %v1672, %v1755
    %v1757 = vpop.f32.mrb[0].mxu0
    %v1758 = vpop.f32.mrb[0].mxu0
    %v1759 = vpop.f32.mrb[0].mxu0
    %1760 = vdwg.mxu0
    %vm1761 = vcmask 24576
    %1762 = vst.msk [vmem:[#allocation12] sm:$0x1] %vm1761, %v1756
    // Predicated region
    $region104: #{gated_gcn_forward.1} parent=1 // pred_check
      _
    $region105: #{gated_gcn_forward.1} parent=1 // pred_check_branch
      %1764 = sbr.rel (0) target = $region107
    $region106: #{gated_gcn_forward.1} parent=1 // pred_region
      %s1766 = ssub.s32 16, 16
      %1767 = vsyncadd [#allocation8], %s1766
      %s1769 = sshll.u32 [#allocation12], 4
      %s1770 = int_to_ptr.vmem [resolvable:$true] %s1769
      %1772 = dma.vmem_to_hbm [thread:$0]  %s1770, 16, %s20, [#allocation8]
    $region107: #{gated_gcn_forward.1} parent=1 // pred_fallthru
      _
    // Predicated region
    $region108: #{gated_gcn_forward.1} parent=1 // pred_check
      _
    $region109: #{gated_gcn_forward.1} parent=1 // pred_check_branch
      %1774 = sbr.rel (0) target = $region111
    $region110: #{gated_gcn_forward.1} parent=1 // pred_region
      %1775 = dma.done [#allocation8], 16
    $region111: #{gated_gcn_forward.1} parent=1 // pred_fallthru
      _
    %1776 = vsyncpa [#allocation8], 1
    %1777 = vsyncpa [#allocation9], 1
    %1778 = vsyncpa [#allocation11], 1

</llo_original>
